<compile_context>
chip_gen: v7x
topology: tpu7x:2x2x1
jax: 0.10.0
libtpu: 0.0.40
codegen_flags: <defaults>
</compile_context>

<pallas_src>
import math
import functools

import jax
import jax.numpy as jnp
from jax.experimental import pallas as pl
from jax.experimental.pallas import tpu as pltpu


_PARAM_ORDER = ("ln1_w", "ln1_b", "wqkv", "bqkv", "wo", "bo",
                "ln2_w", "ln2_b", "wfc", "bfc", "wproj", "bproj")


# -----------------------------------------------------------------------------
# Kernel: one ResidualAttentionBlock per grid step on a (B_blk, L, E) slab.
# The layer axis is the inner ("arbitrary") grid axis; the output block is the
# layer-to-layer carry (resident in VMEM across the layer axis).
# -----------------------------------------------------------------------------
def _resblock_kernel(
    x_ref,                         # (B_blk, L, E) input tokens (used at layer 0)
    ln1_w_ref, ln1_b_ref,          # (1, E) f32
    wqkv_ref, bqkv_ref,            # (E, 3E) bf16, (1, 3E) f32   (q-part pre-scaled)
    wo_ref, bo_ref,                # (E, E)  bf16, (1, E)  f32
    ln2_w_ref, ln2_b_ref,          # (1, E) f32
    wfc_ref, bfc_ref,              # (E, 4E) bf16, (1, 4E) f32
    wproj_ref, bproj_ref,          # (4E, E) bf16, (1, E)  f32
    out_ref,                       # (B_blk, L, E)  residual-stream carry + output
    attn_sc,                       # VMEM scratch (B_blk*L, E) f32
    *,
    n_head: int,
):
    Bb, L, E = x_ref.shape
    M = Bb * L
    d_head = E // n_head
    eps = 1e-5

    # Layer 0: seed the resident carry block from the HBM input slab.
    @pl.when(pl.program_id(1) == 0)
    def _():
        out_ref[...] = x_ref[...]

    # Flatten batch block into the matmul M dimension (f32 for LN/residuals).
    x = out_ref[...].astype(jnp.float32).reshape(M, E)

    def layer_norm(v, w_ref, b_ref):
        mu = jnp.mean(v, axis=-1, keepdims=True)
        var = jnp.mean((v - mu) * (v - mu), axis=-1, keepdims=True)
        return (v - mu) * jax.lax.rsqrt(var + eps) * w_ref[...] + b_ref[...]

    # ---- attention branch ---------------------------------------------------
    h = layer_norm(x, ln1_w_ref, ln1_b_ref).astype(jnp.bfloat16)          # (M, E)
    qkv = jnp.dot(h, wqkv_ref[...], preferred_element_type=jnp.float32)
    qkv = qkv + bqkv_ref[...]                                             # (M, 3E) f32
    qkv3 = qkv.reshape(Bb, L, 3 * E)

    # Per-head batched attention; head outputs are scattered into column
    # slices of the VMEM scratch (no concat, no transposes of values).
    for hh in range(n_head):
        lo = hh * d_head
        qh = qkv3[:, :, lo:lo + d_head].astype(jnp.bfloat16)              # (Bb, L, Dh)
        kh = qkv3[:, :, E + lo:E + lo + d_head].astype(jnp.bfloat16)
        vh = qkv3[:, :, 2 * E + lo:2 * E + lo + d_head].astype(jnp.bfloat16)

        s = jnp.einsum("bqd,bkd->bqk", qh, kh,
                       preferred_element_type=jnp.float32)                # (Bb, L, L)
        s = s - jnp.max(s, axis=-1, keepdims=True)
        p = jnp.exp(s)
        p = p * pl.reciprocal(jnp.sum(p, axis=-1, keepdims=True), approx=False)

        oh = jnp.einsum("bqk,bkd->bqd", p.astype(jnp.bfloat16), vh,
                        preferred_element_type=jnp.float32)               # (Bb, L, Dh)
        attn_sc[:, lo:lo + d_head] = oh.reshape(M, d_head)

    attn = jnp.dot(attn_sc[...].astype(jnp.bfloat16), wo_ref[...],
                   preferred_element_type=jnp.float32) + bo_ref[...]      # (M, E)
    x = x + attn                                                          # residual (f32)

    # ---- MLP branch ----------------------------------------------------------
    h2 = layer_norm(x, ln2_w_ref, ln2_b_ref).astype(jnp.bfloat16)
    m = jnp.dot(h2, wfc_ref[...], preferred_element_type=jnp.float32)
    m = m + bfc_ref[...]                                                  # (M, 4E) f32
    m = m * jax.nn.sigmoid(1.702 * m)                                     # QuickGELU
    m = jnp.dot(m.astype(jnp.bfloat16), wproj_ref[...],
                preferred_element_type=jnp.float32) + bproj_ref[...]      # (M, E)
    x = x + m                                                             # residual (f32)

    out_ref[...] = x.reshape(Bb, L, E).astype(out_ref.dtype)


# -----------------------------------------------------------------------------
# Wrapper: whole layer stack = ONE pallas_call; grid = (batch_block, layer).
# -----------------------------------------------------------------------------
def _choose_batch_block(B, L, target_rows=256):
    """Largest divisor of B with B_blk*L <= target_rows (MXU M-feeding)."""
    if L % 8 != 0:
        # Keep in-kernel reshapes trivially sublane-aligned.
        return 1
    cands = [d for d in range(1, B + 1) if B % d == 0 and d * L <= target_rows]
    if not cands:
        return 1
    # Prefer >= 2 grid steps along batch (megacore sharding) when that still
    # feeds the MXU well.
    multi = [d for d in cands if B // d >= 2]
    if multi and max(multi) * L >= 128:
        return max(multi)
    return max(cands)


def _vmem_limit_bytes(b_blk, L, E):
    m = b_blk * L
    weights = 2 * (12 * E * E) * 2        # bf16 weights, double-buffered by the pipeline
    biases = 2 * (14 * E) * 4             # LN params + biases (f32), double-buffered
    io = 2 * 2 * m * E * 4                # x in + out blocks, double-buffered, f32
    scratch = m * E * 4                   # attention scratch
    live = 3 * m * 4 * E * 4              # headroom for live activations (qkv / mlp hidden)
    est = weights + biases + io + scratch + live
    return max(32 << 20, min(64 << 20, int(est * 1.5)))


def transformer_forward(x_lne, stacked_params, n_head, b_blk=None):
    """x_lne: (L, N, E), seq-first, just like the PyTorch module."""
    L, N, E = x_lne.shape
    layers = stacked_params["wqkv"].shape[0]
    if b_blk is None:
        b_blk = _choose_batch_block(N, L)
    assert N % b_blk == 0

    x_ble = jnp.transpose(x_lne, (1, 0, 2))          # (N, L, E)
    params = [stacked_params[name] for name in _PARAM_ORDER]

    def x_map(b, l):                                  # same x/out block across layers
        return (b, 0, 0)

    def w_map(b, l):                                  # per-layer weight slice
        return (l, 0, 0)

    x_spec = pl.BlockSpec((b_blk, L, E), x_map)
    param_specs = [
        pl.BlockSpec((pl.Squeezed(),) + tuple(p.shape[1:]), w_map) for p in params
    ]

    out = pl.pallas_call(
        functools.partial(_resblock_kernel, n_head=n_head),
        out_shape=jax.ShapeDtypeStruct((N, L, E), x_ble.dtype),
        grid_spec=pltpu.PrefetchScalarGridSpec(
            num_scalar_prefetch=0,
            grid=(N // b_blk, layers),
            in_specs=[x_spec] + param_specs,
            out_specs=pl.BlockSpec((b_blk, L, E), x_map),
            scratch_shapes=[pltpu.VMEM((b_blk * L, E), jnp.float32)],
        ),
        compiler_params=pltpu.CompilerParams(
            dimension_semantics=("parallel", "arbitrary"),
            vmem_limit_bytes=_vmem_limit_bytes(b_blk, L, E),
        ),
    )(x_ble, *params)

    return jnp.transpose(out, (1, 0, 2))              # back to (L, N, E)


# -----------------------------------------------------------------------------
# Parameters: PyTorch-layout init + one-time host-side prep (transpose + bf16,
# softmax scale folded into the q third of in_proj), stacked over layers.
# -----------------------------------------------------------------------------
def init_params(key, width, layers):
    """Deterministic parameters in the PyTorch nn.Module layout."""
    E = width
    all_params = []
    for i in range(layers):
        k = jax.random.fold_in(key, i)
        ks = jax.random.split(k, 4)
        scale = 0.02
        all_params.append({
            "ln1_w": jnp.ones((E,), jnp.float32),
            "ln1_b": jnp.zeros((E,), jnp.float32),
            "in_proj_weight": scale * jax.random.normal(ks[0], (3 * E, E), jnp.float32),
            "in_proj_bias": jnp.zeros((3 * E,), jnp.float32),
            "out_proj_weight": scale * jax.random.normal(ks[1], (E, E), jnp.float32),
            "out_proj_bias": jnp.zeros((E,), jnp.float32),
            "ln2_w": jnp.ones((E,), jnp.float32),
            "ln2_b": jnp.zeros((E,), jnp.float32),
            "c_fc_weight": scale * jax.random.normal(ks[2], (4 * E, E), jnp.float32),
            "c_fc_bias": jnp.zeros((4 * E,), jnp.float32),
            "c_proj_weight": scale * jax.random.normal(ks[3], (E, 4 * E), jnp.float32),
            "c_proj_bias": jnp.zeros((E,), jnp.float32),
        })
    return all_params


def prepare_params(torch_layout_params, n_head, weight_dtype=jnp.bfloat16):
    """One-time host-side prep: pre-transpose weights, cast to bf16, fold the
    1/sqrt(d_head) attention scale into the q slice of in_proj, and stack all
    layers along a leading `layers` axis so one pallas_call can index them."""
    per_layer = []
    for p in torch_layout_params:
        E = p["ln1_w"].shape[-1]
        d_head = E // n_head
        scale = 1.0 / math.sqrt(d_head)
        qkv_scale = jnp.concatenate(
            [jnp.full((E,), scale, jnp.float32), jnp.ones((2 * E,), jnp.float32)])
        wqkv = p["in_proj_weight"].astype(jnp.float32).T * qkv_scale[None, :]   # (E, 3E)
        bqkv = p["in_proj_bias"].astype(jnp.float32) * qkv_scale                # (3E,)
        per_layer.append({
            "ln1_w": p["ln1_w"].reshape(1, E).astype(jnp.float32),
            "ln1_b": p["ln1_b"].reshape(1, E).astype(jnp.float32),
            "wqkv": wqkv.astype(weight_dtype),                                   # (E, 3E)
            "bqkv": bqkv.reshape(1, 3 * E).astype(jnp.float32),
            "wo": p["out_proj_weight"].astype(jnp.float32).T.astype(weight_dtype),   # (E, E)
            "bo": p["out_proj_bias"].reshape(1, E).astype(jnp.float32),
            "ln2_w": p["ln2_w"].reshape(1, E).astype(jnp.float32),
            "ln2_b": p["ln2_b"].reshape(1, E).astype(jnp.float32),
            "wfc": p["c_fc_weight"].astype(jnp.float32).T.astype(weight_dtype),      # (E, 4E)
            "bfc": p["c_fc_bias"].reshape(1, 4 * E).astype(jnp.float32),
            "wproj": p["c_proj_weight"].astype(jnp.float32).T.astype(weight_dtype),  # (4E, E)
            "bproj": p["c_proj_bias"].reshape(1, E).astype(jnp.float32),
        })
    stacked = {name: jnp.stack([lp[name] for lp in per_layer], axis=0)
               for name in _PARAM_ORDER}
    return stacked


if __name__ == "__main__":
    # Small config: width=32, layers=2, heads=4, seq=8, batch=2.
    # NOTE: toy shapes (E=32 < 128 lanes) are for correctness only, not perf.
    WIDTH, LAYERS, HEADS = 32, 2, 4
    SEQ, BATCH = 8, 2

    key = jax.random.PRNGKey(0)
    pkey, xkey = jax.random.split(key)
    params_torch_layout = init_params(pkey, WIDTH, LAYERS)
    params = prepare_params(params_torch_layout, HEADS)

    # PyTorch MultiheadAttention convention: (L, N, E)
    x = jax.random.normal(xkey, (SEQ, BATCH, WIDTH), jnp.float32)

    out = transformer_forward(x, params, HEADS)
    out = jax.block_until_ready(out)

    assert out.shape == (SEQ, BATCH, WIDTH)
    assert jnp.all(jnp.isfinite(out))
    print("KERNEL_OK")
</pallas_src>

<mosaic_0001>
module attributes {stable_mosaic.version = 11 : i64} {
  func.func @_resblock_kernel(%arg0: i32, %arg1: i32, %arg2: memref<2x8x32xf32, #tpu.memory_space<vmem>>, %arg3: memref<1x1x32xf32, #tpu.memory_space<vmem>>, %arg4: memref<1x1x32xf32, #tpu.memory_space<vmem>>, %arg5: memref<1x32x96xbf16, #tpu.memory_space<vmem>>, %arg6: memref<1x1x96xf32, #tpu.memory_space<vmem>>, %arg7: memref<1x32x32xbf16, #tpu.memory_space<vmem>>, %arg8: memref<1x1x32xf32, #tpu.memory_space<vmem>>, %arg9: memref<1x1x32xf32, #tpu.memory_space<vmem>>, %arg10: memref<1x1x32xf32, #tpu.memory_space<vmem>>, %arg11: memref<1x32x128xbf16, #tpu.memory_space<vmem>>, %arg12: memref<1x1x128xf32, #tpu.memory_space<vmem>>, %arg13: memref<1x128x32xbf16, #tpu.memory_space<vmem>>, %arg14: memref<1x1x32xf32, #tpu.memory_space<vmem>>, %arg15: memref<2x8x32xf32, #tpu.memory_space<vmem>>, %arg16: memref<16x32xf32, #tpu.memory_space<vmem>>) attributes {dimension_semantics = [#tpu.dimension_semantics<parallel>, #tpu.dimension_semantics<arbitrary>], iteration_bounds = array<i64: 1, 2>, scalar_prefetch = 0 : i64, scratch_operands = 1 : i64, tpu.core_type = #tpu.core_type<tc>, window_params = [{transform_indices = @transform_0, window_bounds = array<i64: 2, 8, 32>}, {transform_indices = @transform_1, window_bounds = array<i64: 1, 1, 32>}, {transform_indices = @transform_2, window_bounds = array<i64: 1, 1, 32>}, {transform_indices = @transform_3, window_bounds = array<i64: 1, 32, 96>}, {transform_indices = @transform_4, window_bounds = array<i64: 1, 1, 96>}, {transform_indices = @transform_5, window_bounds = array<i64: 1, 32, 32>}, {transform_indices = @transform_6, window_bounds = array<i64: 1, 1, 32>}, {transform_indices = @transform_7, window_bounds = array<i64: 1, 1, 32>}, {transform_indices = @transform_8, window_bounds = array<i64: 1, 1, 32>}, {transform_indices = @transform_9, window_bounds = array<i64: 1, 32, 128>}, {transform_indices = @transform_10, window_bounds = array<i64: 1, 1, 128>}, {transform_indices = @transform_11, window_bounds = array<i64: 1, 128, 32>}, {transform_indices = @transform_12, window_bounds = array<i64: 1, 1, 32>}, {transform_indices = @transform_13, window_bounds = array<i64: 2, 8, 32>}]} {
    %c0_i32 = arith.constant 0 : i32
    %0 = arith.cmpi eq, %arg1, %c0_i32 : i32
    %1 = arith.extui %0 : i1 to i32
    %c0_i32_0 = arith.constant 0 : i32
    %2 = arith.cmpi ne, %1, %c0_i32_0 : i32
    scf.if %2 {
      %c0_80 = arith.constant 0 : index
      %c0_81 = arith.constant 0 : index
      %c0_82 = arith.constant 0 : index
      %191 = vector.load %arg2[%c0_80, %c0_81, %c0_82] : memref<2x8x32xf32, #tpu.memory_space<vmem>>, vector<2x8x32xf32>
      %c0_83 = arith.constant 0 : index
      %c0_84 = arith.constant 0 : index
      %c0_85 = arith.constant 0 : index
      %192 = vector.load %arg15[%c0_83, %c0_84, %c0_85] : memref<2x8x32xf32, #tpu.memory_space<vmem>>, vector<2x8x32xf32>
      tpu.vector_store %arg15[%c0_83, %c0_84, %c0_85], %191 {strides = array<i32>} : memref<2x8x32xf32, #tpu.memory_space<vmem>>, vector<2x8x32xf32>,
    } else {
    }
    %c0 = arith.constant 0 : index
    %c0_1 = arith.constant 0 : index
    %c0_2 = arith.constant 0 : index
    %3 = vector.load %arg15[%c0, %c0_1, %c0_2] : memref<2x8x32xf32, #tpu.memory_space<vmem>>, vector<2x8x32xf32>
    %4 = vector.shape_cast %3 : vector<2x8x32xf32> to vector<16x32xf32>
    %cst = arith.constant dense<0.000000e+00> : vector<16xf32>
    %5 = vector.multi_reduction <add>, %4, %cst [1] : vector<16x32xf32> to vector<16xf32>
    %6 = vector.shape_cast %5 : vector<16xf32> to vector<16x1xf32>
    %cst_3 = arith.constant 3.200000e+01 : f32
    %7 = vector.broadcast %cst_3 : f32 to vector<16x1xf32>
    %8 = arith.divf %6, %7 : vector<16x1xf32>
    %9 = vector.broadcast %8 : vector<16x1xf32> to vector<16x32xf32>
    %10 = arith.subf %4, %9 : vector<16x32xf32>
    %11 = vector.broadcast %8 : vector<16x1xf32> to vector<16x32xf32>
    %12 = arith.subf %4, %11 : vector<16x32xf32>
    %13 = arith.mulf %10, %12 : vector<16x32xf32>
    %cst_4 = arith.constant dense<0.000000e+00> : vector<16xf32>
    %14 = vector.multi_reduction <add>, %13, %cst_4 [1] : vector<16x32xf32> to vector<16xf32>
    %15 = vector.shape_cast %14 : vector<16xf32> to vector<16x1xf32>
    %cst_5 = arith.constant 3.200000e+01 : f32
    %16 = vector.broadcast %cst_5 : f32 to vector<16x1xf32>
    %17 = arith.divf %15, %16 : vector<16x1xf32>
    %18 = vector.broadcast %8 : vector<16x1xf32> to vector<16x32xf32>
    %19 = arith.subf %4, %18 : vector<16x32xf32>
    %cst_6 = arith.constant 9.99999974E-6 : f32
    %20 = vector.broadcast %cst_6 : f32 to vector<16x1xf32>
    %21 = arith.addf %17, %20 : vector<16x1xf32>
    %22 = math.rsqrt %21 : vector<16x1xf32>
    %23 = vector.broadcast %22 : vector<16x1xf32> to vector<16x32xf32>
    %24 = arith.mulf %19, %23 : vector<16x32xf32>
    %c0_7 = arith.constant 0 : index
    %c0_8 = arith.constant 0 : index
    %c0_9 = arith.constant 0 : index
    %25 = vector.load %arg3[%c0_7, %c0_8, %c0_9] : memref<1x1x32xf32, #tpu.memory_space<vmem>>, vector<1x1x32xf32>
    %26 = vector.shape_cast %25 : vector<1x1x32xf32> to vector<1x32xf32>
    %27 = vector.broadcast %26 : vector<1x32xf32> to vector<16x32xf32>
    %28 = arith.mulf %24, %27 : vector<16x32xf32>
    %c0_10 = arith.constant 0 : index
    %c0_11 = arith.constant 0 : index
    %c0_12 = arith.constant 0 : index
    %29 = vector.load %arg4[%c0_10, %c0_11, %c0_12] : memref<1x1x32xf32, #tpu.memory_space<vmem>>, vector<1x1x32xf32>
    %30 = vector.shape_cast %29 : vector<1x1x32xf32> to vector<1x32xf32>
    %31 = vector.broadcast %30 : vector<1x32xf32> to vector<16x32xf32>
    %32 = arith.addf %28, %31 : vector<16x32xf32>
    %33 = arith.truncf %32 : vector<16x32xf32> to vector<16x32xbf16>
    %c0_13 = arith.constant 0 : index
    %c0_14 = arith.constant 0 : index
    %c0_15 = arith.constant 0 : index
    %34 = vector.load %arg5[%c0_13, %c0_14, %c0_15] : memref<1x32x96xbf16, #tpu.memory_space<vmem>>, vector<1x32x96xbf16>
    %35 = vector.shape_cast %34 : vector<1x32x96xbf16> to vector<32x96xbf16>
    %cst_16 = arith.constant dense<0.000000e+00> : vector<16x96xf32>
    %36 = tpu.matmul %33, %35, %cst_16 {dimension_numbers = #tpu.dot_dimension_numbers<[1], [0], [0], [1], [0, 0, 1, 1], [], []>} : vector<16x32xbf16>, vector<32x96xbf16>, vector<16x96xf32> -> vector<16x96xf32>
    %c0_17 = arith.constant 0 : index
    %c0_18 = arith.constant 0 : index
    %c0_19 = arith.constant 0 : index
    %37 = vector.load %arg6[%c0_17, %c0_18, %c0_19] : memref<1x1x96xf32, #tpu.memory_space<vmem>>, vector<1x1x96xf32>
    %38 = vector.shape_cast %37 : vector<1x1x96xf32> to vector<1x96xf32>
    %39 = vector.broadcast %38 : vector<1x96xf32> to vector<16x96xf32>
    %40 = arith.addf %36, %39 : vector<16x96xf32>
    %41 = vector.shape_cast %40 : vector<16x96xf32> to vector<2x8x96xf32>
    %42 = vector.extract_strided_slice %41 {offsets = [0, 0, 0], sizes = [2, 8, 8], strides = [1, 1, 1]} : vector<2x8x96xf32> to vector<2x8x8xf32>
    %43 = arith.truncf %42 : vector<2x8x8xf32> to vector<2x8x8xbf16>
    %44 = vector.extract_strided_slice %41 {offsets = [0, 0, 32], sizes = [2, 8, 8], strides = [1, 1, 1]} : vector<2x8x96xf32> to vector<2x8x8xf32>
    %45 = arith.truncf %44 : vector<2x8x8xf32> to vector<2x8x8xbf16>
    %46 = vector.extract_strided_slice %41 {offsets = [0, 0, 64], sizes = [2, 8, 8], strides = [1, 1, 1]} : vector<2x8x96xf32> to vector<2x8x8xf32>
    %47 = arith.truncf %46 : vector<2x8x8xf32> to vector<2x8x8xbf16>
    "tpu.trace_start"() <{level = 10 : i32, message = "bqd,bkd->bqk"}> : () -> ()
    %cst_20 = arith.constant dense<0.000000e+00> : vector<2x8x8xf32>
    %48 = tpu.matmul %43, %45, %cst_20 {dimension_numbers = #tpu.dot_dimension_numbers<[2], [2], [1], [1], [0, 0, 0, 1, 1, 1], [0], [0]>} : vector<2x8x8xbf16>, vector<2x8x8xbf16>, vector<2x8x8xf32> -> vector<2x8x8xf32>
    "tpu.trace_stop"() : () -> ()
    %cst_21 = arith.constant dense<0xFF800000> : vector<2x8xf32>
    %49 = vector.multi_reduction <maximumf>, %48, %cst_21 [2] : vector<2x8x8xf32> to vector<2x8xf32>
    %50 = vector.shape_cast %49 : vector<2x8xf32> to vector<2x8x1xf32>
    %51 = vector.broadcast %50 : vector<2x8x1xf32> to vector<2x8x8xf32>
    %52 = arith.subf %48, %51 : vector<2x8x8xf32>
    %53 = math.exp %52 : vector<2x8x8xf32>
    %cst_22 = arith.constant dense<0.000000e+00> : vector<2x8xf32>
    %54 = vector.multi_reduction <add>, %53, %cst_22 [2] : vector<2x8x8xf32> to vector<2x8xf32>
    %55 = vector.shape_cast %54 : vector<2x8xf32> to vector<2x8x1xf32>
    %56 = tpu.reciprocal %55 : vector<2x8x1xf32> -> vector<2x8x1xf32>
    %57 = vector.broadcast %56 : vector<2x8x1xf32> to vector<2x8x8xf32>
    %58 = arith.mulf %53, %57 : vector<2x8x8xf32>
    %59 = arith.truncf %58 : vector<2x8x8xf32> to vector<2x8x8xbf16>
    "tpu.trace_start"() <{level = 10 : i32, message = "bqk,bkd->bqd"}> : () -> ()
    %cst_23 = arith.constant dense<0.000000e+00> : vector<2x8x8xf32>
    %60 = tpu.matmul %59, %47, %cst_23 {dimension_numbers = #tpu.dot_dimension_numbers<[2], [1], [1], [2], [0, 0, 0, 1, 1, 2], [0], [0]>} : vector<2x8x8xbf16>, vector<2x8x8xbf16>, vector<2x8x8xf32> -> vector<2x8x8xf32>
    "tpu.trace_stop"() : () -> ()
    %61 = vector.shape_cast %60 : vector<2x8x8xf32> to vector<16x8xf32>
    %c0_24 = arith.constant 0 : index
    %c0_25 = arith.constant 0 : index
    %62 = vector.load %arg16[%c0_24, %c0_25] : memref<16x32xf32, #tpu.memory_space<vmem>>, vector<16x8xf32>
    tpu.vector_store %arg16[%c0_24, %c0_25], %61 {strides = array<i32>} : memref<16x32xf32, #tpu.memory_space<vmem>>, vector<16x8xf32>,
    %63 = vector.extract_strided_slice %41 {offsets = [0, 0, 8], sizes = [2, 8, 8], strides = [1, 1, 1]} : vector<2x8x96xf32> to vector<2x8x8xf32>
    %64 = arith.truncf %63 : vector<2x8x8xf32> to vector<2x8x8xbf16>
    %65 = vector.extract_strided_slice %41 {offsets = [0, 0, 40], sizes = [2, 8, 8], strides = [1, 1, 1]} : vector<2x8x96xf32> to vector<2x8x8xf32>
    %66 = arith.truncf %65 : vector<2x8x8xf32> to vector<2x8x8xbf16>
    %67 = vector.extract_strided_slice %41 {offsets = [0, 0, 72], sizes = [2, 8, 8], strides = [1, 1, 1]} : vector<2x8x96xf32> to vector<2x8x8xf32>
    %68 = arith.truncf %67 : vector<2x8x8xf32> to vector<2x8x8xbf16>
    "tpu.trace_start"() <{level = 10 : i32, message = "bqd,bkd->bqk"}> : () -> ()
    %cst_26 = arith.constant dense<0.000000e+00> : vector<2x8x8xf32>
    %69 = tpu.matmul %64, %66, %cst_26 {dimension_numbers = #tpu.dot_dimension_numbers<[2], [2], [1], [1], [0, 0, 0, 1, 1, 1], [0], [0]>} : vector<2x8x8xbf16>, vector<2x8x8xbf16>, vector<2x8x8xf32> -> vector<2x8x8xf32>
    "tpu.trace_stop"() : () -> ()
    %cst_27 = arith.constant dense<0xFF800000> : vector<2x8xf32>
    %70 = vector.multi_reduction <maximumf>, %69, %cst_27 [2] : vector<2x8x8xf32> to vector<2x8xf32>
    %71 = vector.shape_cast %70 : vector<2x8xf32> to vector<2x8x1xf32>
    %72 = vector.broadcast %71 : vector<2x8x1xf32> to vector<2x8x8xf32>
    %73 = arith.subf %69, %72 : vector<2x8x8xf32>
    %74 = math.exp %73 : vector<2x8x8xf32>
    %cst_28 = arith.constant dense<0.000000e+00> : vector<2x8xf32>
    %75 = vector.multi_reduction <add>, %74, %cst_28 [2] : vector<2x8x8xf32> to vector<2x8xf32>
    %76 = vector.shape_cast %75 : vector<2x8xf32> to vector<2x8x1xf32>
    %77 = tpu.reciprocal %76 : vector<2x8x1xf32> -> vector<2x8x1xf32>
    %78 = vector.broadcast %77 : vector<2x8x1xf32> to vector<2x8x8xf32>
    %79 = arith.mulf %74, %78 : vector<2x8x8xf32>
    %80 = arith.truncf %79 : vector<2x8x8xf32> to vector<2x8x8xbf16>
    "tpu.trace_start"() <{level = 10 : i32, message = "bqk,bkd->bqd"}> : () -> ()
    %cst_29 = arith.constant dense<0.000000e+00> : vector<2x8x8xf32>
    %81 = tpu.matmul %80, %68, %cst_29 {dimension_numbers = #tpu.dot_dimension_numbers<[2], [1], [1], [2], [0, 0, 0, 1, 1, 2], [0], [0]>} : vector<2x8x8xbf16>, vector<2x8x8xbf16>, vector<2x8x8xf32> -> vector<2x8x8xf32>
    "tpu.trace_stop"() : () -> ()
    %82 = vector.shape_cast %81 : vector<2x8x8xf32> to vector<16x8xf32>
    %c0_30 = arith.constant 0 : index
    %c8 = arith.constant 8 : index
    %83 = vector.load %arg16[%c0_30, %c8] : memref<16x32xf32, #tpu.memory_space<vmem>>, vector<16x8xf32>
    tpu.vector_store %arg16[%c0_30, %c8], %82 {strides = array<i32>} : memref<16x32xf32, #tpu.memory_space<vmem>>, vector<16x8xf32>,
    %84 = vector.extract_strided_slice %41 {offsets = [0, 0, 16], sizes = [2, 8, 8], strides = [1, 1, 1]} : vector<2x8x96xf32> to vector<2x8x8xf32>
    %85 = arith.truncf %84 : vector<2x8x8xf32> to vector<2x8x8xbf16>
    %86 = vector.extract_strided_slice %41 {offsets = [0, 0, 48], sizes = [2, 8, 8], strides = [1, 1, 1]} : vector<2x8x96xf32> to vector<2x8x8xf32>
    %87 = arith.truncf %86 : vector<2x8x8xf32> to vector<2x8x8xbf16>
    %88 = vector.extract_strided_slice %41 {offsets = [0, 0, 80], sizes = [2, 8, 8], strides = [1, 1, 1]} : vector<2x8x96xf32> to vector<2x8x8xf32>
    %89 = arith.truncf %88 : vector<2x8x8xf32> to vector<2x8x8xbf16>
    "tpu.trace_start"() <{level = 10 : i32, message = "bqd,bkd->bqk"}> : () -> ()
    %cst_31 = arith.constant dense<0.000000e+00> : vector<2x8x8xf32>
    %90 = tpu.matmul %85, %87, %cst_31 {dimension_numbers = #tpu.dot_dimension_numbers<[2], [2], [1], [1], [0, 0, 0, 1, 1, 1], [0], [0]>} : vector<2x8x8xbf16>, vector<2x8x8xbf16>, vector<2x8x8xf32> -> vector<2x8x8xf32>
    "tpu.trace_stop"() : () -> ()
    %cst_32 = arith.constant dense<0xFF800000> : vector<2x8xf32>
    %91 = vector.multi_reduction <maximumf>, %90, %cst_32 [2] : vector<2x8x8xf32> to vector<2x8xf32>
    %92 = vector.shape_cast %91 : vector<2x8xf32> to vector<2x8x1xf32>
    %93 = vector.broadcast %92 : vector<2x8x1xf32> to vector<2x8x8xf32>
    %94 = arith.subf %90, %93 : vector<2x8x8xf32>
    %95 = math.exp %94 : vector<2x8x8xf32>
    %cst_33 = arith.constant dense<0.000000e+00> : vector<2x8xf32>
    %96 = vector.multi_reduction <add>, %95, %cst_33 [2] : vector<2x8x8xf32> to vector<2x8xf32>
    %97 = vector.shape_cast %96 : vector<2x8xf32> to vector<2x8x1xf32>
    %98 = tpu.reciprocal %97 : vector<2x8x1xf32> -> vector<2x8x1xf32>
    %99 = vector.broadcast %98 : vector<2x8x1xf32> to vector<2x8x8xf32>
    %100 = arith.mulf %95, %99 : vector<2x8x8xf32>
    %101 = arith.truncf %100 : vector<2x8x8xf32> to vector<2x8x8xbf16>
    "tpu.trace_start"() <{level = 10 : i32, message = "bqk,bkd->bqd"}> : () -> ()
    %cst_34 = arith.constant dense<0.000000e+00> : vector<2x8x8xf32>
    %102 = tpu.matmul %101, %89, %cst_34 {dimension_numbers = #tpu.dot_dimension_numbers<[2], [1], [1], [2], [0, 0, 0, 1, 1, 2], [0], [0]>} : vector<2x8x8xbf16>, vector<2x8x8xbf16>, vector<2x8x8xf32> -> vector<2x8x8xf32>
    "tpu.trace_stop"() : () -> ()
    %103 = vector.shape_cast %102 : vector<2x8x8xf32> to vector<16x8xf32>
    %c0_35 = arith.constant 0 : index
    %c16 = arith.constant 16 : index
    %104 = vector.load %arg16[%c0_35, %c16] : memref<16x32xf32, #tpu.memory_space<vmem>>, vector<16x8xf32>
    tpu.vector_store %arg16[%c0_35, %c16], %103 {strides = array<i32>} : memref<16x32xf32, #tpu.memory_space<vmem>>, vector<16x8xf32>,
    %105 = vector.extract_strided_slice %41 {offsets = [0, 0, 24], sizes = [2, 8, 8], strides = [1, 1, 1]} : vector<2x8x96xf32> to vector<2x8x8xf32>
    %106 = arith.truncf %105 : vector<2x8x8xf32> to vector<2x8x8xbf16>
    %107 = vector.extract_strided_slice %41 {offsets = [0, 0, 56], sizes = [2, 8, 8], strides = [1, 1, 1]} : vector<2x8x96xf32> to vector<2x8x8xf32>
    %108 = arith.truncf %107 : vector<2x8x8xf32> to vector<2x8x8xbf16>
    %109 = vector.extract_strided_slice %41 {offsets = [0, 0, 88], sizes = [2, 8, 8], strides = [1, 1, 1]} : vector<2x8x96xf32> to vector<2x8x8xf32>
    %110 = arith.truncf %109 : vector<2x8x8xf32> to vector<2x8x8xbf16>
    "tpu.trace_start"() <{level = 10 : i32, message = "bqd,bkd->bqk"}> : () -> ()
    %cst_36 = arith.constant dense<0.000000e+00> : vector<2x8x8xf32>
    %111 = tpu.matmul %106, %108, %cst_36 {dimension_numbers = #tpu.dot_dimension_numbers<[2], [2], [1], [1], [0, 0, 0, 1, 1, 1], [0], [0]>} : vector<2x8x8xbf16>, vector<2x8x8xbf16>, vector<2x8x8xf32> -> vector<2x8x8xf32>
    "tpu.trace_stop"() : () -> ()
    %cst_37 = arith.constant dense<0xFF800000> : vector<2x8xf32>
    %112 = vector.multi_reduction <maximumf>, %111, %cst_37 [2] : vector<2x8x8xf32> to vector<2x8xf32>
    %113 = vector.shape_cast %112 : vector<2x8xf32> to vector<2x8x1xf32>
    %114 = vector.broadcast %113 : vector<2x8x1xf32> to vector<2x8x8xf32>
    %115 = arith.subf %111, %114 : vector<2x8x8xf32>
    %116 = math.exp %115 : vector<2x8x8xf32>
    %cst_38 = arith.constant dense<0.000000e+00> : vector<2x8xf32>
    %117 = vector.multi_reduction <add>, %116, %cst_38 [2] : vector<2x8x8xf32> to vector<2x8xf32>
    %118 = vector.shape_cast %117 : vector<2x8xf32> to vector<2x8x1xf32>
    %119 = tpu.reciprocal %118 : vector<2x8x1xf32> -> vector<2x8x1xf32>
    %120 = vector.broadcast %119 : vector<2x8x1xf32> to vector<2x8x8xf32>
    %121 = arith.mulf %116, %120 : vector<2x8x8xf32>
    %122 = arith.truncf %121 : vector<2x8x8xf32> to vector<2x8x8xbf16>
    "tpu.trace_start"() <{level = 10 : i32, message = "bqk,bkd->bqd"}> : () -> ()
    %cst_39 = arith.constant dense<0.000000e+00> : vector<2x8x8xf32>
    %123 = tpu.matmul %122, %110, %cst_39 {dimension_numbers = #tpu.dot_dimension_numbers<[2], [1], [1], [2], [0, 0, 0, 1, 1, 2], [0], [0]>} : vector<2x8x8xbf16>, vector<2x8x8xbf16>, vector<2x8x8xf32> -> vector<2x8x8xf32>
    "tpu.trace_stop"() : () -> ()
    %124 = vector.shape_cast %123 : vector<2x8x8xf32> to vector<16x8xf32>
    %c0_40 = arith.constant 0 : index
    %c24 = arith.constant 24 : index
    %125 = vector.load %arg16[%c0_40, %c24] : memref<16x32xf32, #tpu.memory_space<vmem>>, vector<16x8xf32>
    tpu.vector_store %arg16[%c0_40, %c24], %124 {strides = array<i32>} : memref<16x32xf32, #tpu.memory_space<vmem>>, vector<16x8xf32>,
    %c0_41 = arith.constant 0 : index
    %c0_42 = arith.constant 0 : index
    %126 = vector.load %arg16[%c0_41, %c0_42] : memref<16x32xf32, #tpu.memory_space<vmem>>, vector<16x32xf32>
    %127 = arith.truncf %126 : vector<16x32xf32> to vector<16x32xbf16>
    %c0_43 = arith.constant 0 : index
    %c0_44 = arith.constant 0 : index
    %c0_45 = arith.constant 0 : index
    %128 = vector.load %arg7[%c0_43, %c0_44, %c0_45] : memref<1x32x32xbf16, #tpu.memory_space<vmem>>, vector<1x32x32xbf16>
    %129 = vector.shape_cast %128 : vector<1x32x32xbf16> to vector<32x32xbf16>
    %cst_46 = arith.constant dense<0.000000e+00> : vector<16x32xf32>
    %130 = tpu.matmul %127, %129, %cst_46 {dimension_numbers = #tpu.dot_dimension_numbers<[1], [0], [0], [1], [0, 0, 1, 1], [], []>} : vector<16x32xbf16>, vector<32x32xbf16>, vector<16x32xf32> -> vector<16x32xf32>
    %c0_47 = arith.constant 0 : index
    %c0_48 = arith.constant 0 : index
    %c0_49 = arith.constant 0 : index
    %131 = vector.load %arg8[%c0_47, %c0_48, %c0_49] : memref<1x1x32xf32, #tpu.memory_space<vmem>>, vector<1x1x32xf32>
    %132 = vector.shape_cast %131 : vector<1x1x32xf32> to vector<1x32xf32>
    %133 = vector.broadcast %132 : vector<1x32xf32> to vector<16x32xf32>
    %134 = arith.addf %130, %133 : vector<16x32xf32>
    %135 = arith.addf %4, %134 : vector<16x32xf32>
    %cst_50 = arith.constant dense<0.000000e+00> : vector<16xf32>
    %136 = vector.multi_reduction <add>, %135, %cst_50 [1] : vector<16x32xf32> to vector<16xf32>
    %137 = vector.shape_cast %136 : vector<16xf32> to vector<16x1xf32>
    %cst_51 = arith.constant 3.200000e+01 : f32
    %138 = vector.broadcast %cst_51 : f32 to vector<16x1xf32>
    %139 = arith.divf %137, %138 : vector<16x1xf32>
    %140 = vector.broadcast %139 : vector<16x1xf32> to vector<16x32xf32>
    %141 = arith.subf %135, %140 : vector<16x32xf32>
    %142 = vector.broadcast %139 : vector<16x1xf32> to vector<16x32xf32>
    %143 = arith.subf %135, %142 : vector<16x32xf32>
    %144 = arith.mulf %141, %143 : vector<16x32xf32>
    %cst_52 = arith.constant dense<0.000000e+00> : vector<16xf32>
    %145 = vector.multi_reduction <add>, %144, %cst_52 [1] : vector<16x32xf32> to vector<16xf32>
    %146 = vector.shape_cast %145 : vector<16xf32> to vector<16x1xf32>
    %cst_53 = arith.constant 3.200000e+01 : f32
    %147 = vector.broadcast %cst_53 : f32 to vector<16x1xf32>
    %148 = arith.divf %146, %147 : vector<16x1xf32>
    %149 = vector.broadcast %139 : vector<16x1xf32> to vector<16x32xf32>
    %150 = arith.subf %135, %149 : vector<16x32xf32>
    %cst_54 = arith.constant 9.99999974E-6 : f32
    %151 = vector.broadcast %cst_54 : f32 to vector<16x1xf32>
    %152 = arith.addf %148, %151 : vector<16x1xf32>
    %153 = math.rsqrt %152 : vector<16x1xf32>
    %154 = vector.broadcast %153 : vector<16x1xf32> to vector<16x32xf32>
    %155 = arith.mulf %150, %154 : vector<16x32xf32>
    %c0_55 = arith.constant 0 : index
    %c0_56 = arith.constant 0 : index
    %c0_57 = arith.constant 0 : index
    %156 = vector.load %arg9[%c0_55, %c0_56, %c0_57] : memref<1x1x32xf32, #tpu.memory_space<vmem>>, vector<1x1x32xf32>
    %157 = vector.shape_cast %156 : vector<1x1x32xf32> to vector<1x32xf32>
    %158 = vector.broadcast %157 : vector<1x32xf32> to vector<16x32xf32>
    %159 = arith.mulf %155, %158 : vector<16x32xf32>
    %c0_58 = arith.constant 0 : index
    %c0_59 = arith.constant 0 : index
    %c0_60 = arith.constant 0 : index
    %160 = vector.load %arg10[%c0_58, %c0_59, %c0_60] : memref<1x1x32xf32, #tpu.memory_space<vmem>>, vector<1x1x32xf32>
    %161 = vector.shape_cast %160 : vector<1x1x32xf32> to vector<1x32xf32>
    %162 = vector.broadcast %161 : vector<1x32xf32> to vector<16x32xf32>
    %163 = arith.addf %159, %162 : vector<16x32xf32>
    %164 = arith.truncf %163 : vector<16x32xf32> to vector<16x32xbf16>
    %c0_61 = arith.constant 0 : index
    %c0_62 = arith.constant 0 : index
    %c0_63 = arith.constant 0 : index
    %165 = vector.load %arg11[%c0_61, %c0_62, %c0_63] : memref<1x32x128xbf16, #tpu.memory_space<vmem>>, vector<1x32x128xbf16>
    %166 = vector.shape_cast %165 : vector<1x32x128xbf16> to vector<32x128xbf16>
    %cst_64 = arith.constant dense<0.000000e+00> : vector<16x128xf32>
    %167 = tpu.matmul %164, %166, %cst_64 {dimension_numbers = #tpu.dot_dimension_numbers<[1], [0], [0], [1], [0, 0, 1, 1], [], []>} : vector<16x32xbf16>, vector<32x128xbf16>, vector<16x128xf32> -> vector<16x128xf32>
    %c0_65 = arith.constant 0 : index
    %c0_66 = arith.constant 0 : index
    %c0_67 = arith.constant 0 : index
    %168 = vector.load %arg12[%c0_65, %c0_66, %c0_67] : memref<1x1x128xf32, #tpu.memory_space<vmem>>, vector<1x1x128xf32>
    %169 = vector.shape_cast %168 : vector<1x1x128xf32> to vector<1x128xf32>
    %170 = vector.broadcast %169 : vector<1x128xf32> to vector<16x128xf32>
    %171 = arith.addf %167, %170 : vector<16x128xf32>
    %cst_68 = arith.constant 1.702000e+00 : f32
    %172 = vector.broadcast %cst_68 : f32 to vector<16x128xf32>
    %173 = arith.mulf %172, %171 : vector<16x128xf32>
    %174 = arith.negf %173 : vector<16x128xf32>
    %175 = math.exp %174 : vector<16x128xf32>
    %cst_69 = arith.constant 1.000000e+00 : f32
    %176 = vector.broadcast %cst_69 : f32 to vector<16x128xf32>
    %177 = arith.addf %176, %175 : vector<16x128xf32>
    %178 = arith.divf %176, %177 : vector<16x128xf32>
    %179 = arith.mulf %171, %178 : vector<16x128xf32>
    %180 = arith.truncf %179 : vector<16x128xf32> to vector<16x128xbf16>
    %c0_70 = arith.constant 0 : index
    %c0_71 = arith.constant 0 : index
    %c0_72 = arith.constant 0 : index
    %181 = vector.load %arg13[%c0_70, %c0_71, %c0_72] : memref<1x128x32xbf16, #tpu.memory_space<vmem>>, vector<1x128x32xbf16>
    %182 = vector.shape_cast %181 : vector<1x128x32xbf16> to vector<128x32xbf16>
    %cst_73 = arith.constant dense<0.000000e+00> : vector<16x32xf32>
    %183 = tpu.matmul %180, %182, %cst_73 {dimension_numbers = #tpu.dot_dimension_numbers<[1], [0], [0], [1], [0, 0, 1, 1], [], []>} : vector<16x128xbf16>, vector<128x32xbf16>, vector<16x32xf32> -> vector<16x32xf32>
    %c0_74 = arith.constant 0 : index
    %c0_75 = arith.constant 0 : index
    %c0_76 = arith.constant 0 : index
    %184 = vector.load %arg14[%c0_74, %c0_75, %c0_76] : memref<1x1x32xf32, #tpu.memory_space<vmem>>, vector<1x1x32xf32>
    %185 = vector.shape_cast %184 : vector<1x1x32xf32> to vector<1x32xf32>
    %186 = vector.broadcast %185 : vector<1x32xf32> to vector<16x32xf32>
    %187 = arith.addf %183, %186 : vector<16x32xf32>
    %188 = arith.addf %135, %187 : vector<16x32xf32>
    %189 = vector.shape_cast %188 : vector<16x32xf32> to vector<2x8x32xf32>
    %c0_77 = arith.constant 0 : index
    %c0_78 = arith.constant 0 : index
    %c0_79 = arith.constant 0 : index
    %190 = vector.load %arg15[%c0_77, %c0_78, %c0_79] : memref<2x8x32xf32, #tpu.memory_space<vmem>>, vector<2x8x32xf32>
    tpu.vector_store %arg15[%c0_77, %c0_78, %c0_79], %189 {strides = array<i32>} : memref<2x8x32xf32, #tpu.memory_space<vmem>>, vector<2x8x32xf32>,
    return
  }
  func.func @transform_0(%arg0: i32, %arg1: i32) -> (i32, i32, i32) {
    %c0_i32 = arith.constant 0 : i32
    %c0_i32_0 = arith.constant 0 : i32
    %c0_i32_1 = arith.constant 0 : i32
    return %arg0, %c0_i32, %c0_i32_0 : i32, i32, i32
  }
  func.func @transform_1(%arg0: i32, %arg1: i32) -> (i32, i32, i32) {
    %c0_i32 = arith.constant 0 : i32
    %c0_i32_0 = arith.constant 0 : i32
    %c0_i32_1 = arith.constant 0 : i32
    return %arg1, %c0_i32, %c0_i32_0 : i32, i32, i32
  }
  func.func @transform_2(%arg0: i32, %arg1: i32) -> (i32, i32, i32) {
    %c0_i32 = arith.constant 0 : i32
    %c0_i32_0 = arith.constant 0 : i32
    %c0_i32_1 = arith.constant 0 : i32
    return %arg1, %c0_i32, %c0_i32_0 : i32, i32, i32
  }
  func.func @transform_3(%arg0: i32, %arg1: i32) -> (i32, i32, i32) {
    %c0_i32 = arith.constant 0 : i32
    %c0_i32_0 = arith.constant 0 : i32
    %c0_i32_1 = arith.constant 0 : i32
    return %arg1, %c0_i32, %c0_i32_0 : i32, i32, i32
  }
  func.func @transform_4(%arg0: i32, %arg1: i32) -> (i32, i32, i32) {
    %c0_i32 = arith.constant 0 : i32
    %c0_i32_0 = arith.constant 0 : i32
    %c0_i32_1 = arith.constant 0 : i32
    return %arg1, %c0_i32, %c0_i32_0 : i32, i32, i32
  }
  func.func @transform_5(%arg0: i32, %arg1: i32) -> (i32, i32, i32) {
    %c0_i32 = arith.constant 0 : i32
    %c0_i32_0 = arith.constant 0 : i32
    %c0_i32_1 = arith.constant 0 : i32
    return %arg1, %c0_i32, %c0_i32_0 : i32, i32, i32
  }
  func.func @transform_6(%arg0: i32, %arg1: i32) -> (i32, i32, i32) {
    %c0_i32 = arith.constant 0 : i32
    %c0_i32_0 = arith.constant 0 : i32
    %c0_i32_1 = arith.constant 0 : i32
    return %arg1, %c0_i32, %c0_i32_0 : i32, i32, i32
  }
  func.func @transform_7(%arg0: i32, %arg1: i32) -> (i32, i32, i32) {
    %c0_i32 = arith.constant 0 : i32
    %c0_i32_0 = arith.constant 0 : i32
    %c0_i32_1 = arith.constant 0 : i32
    return %arg1, %c0_i32, %c0_i32_0 : i32, i32, i32
  }
  func.func @transform_8(%arg0: i32, %arg1: i32) -> (i32, i32, i32) {
    %c0_i32 = arith.constant 0 : i32
    %c0_i32_0 = arith.constant 0 : i32
    %c0_i32_1 = arith.constant 0 : i32
    return %arg1, %c0_i32, %c0_i32_0 : i32, i32, i32
  }
  func.func @transform_9(%arg0: i32, %arg1: i32) -> (i32, i32, i32) {
    %c0_i32 = arith.constant 0 : i32
    %c0_i32_0 = arith.constant 0 : i32
    %c0_i32_1 = arith.constant 0 : i32
    return %arg1, %c0_i32, %c0_i32_0 : i32, i32, i32
  }
  func.func @transform_10(%arg0: i32, %arg1: i32) -> (i32, i32, i32) {
    %c0_i32 = arith.constant 0 : i32
    %c0_i32_0 = arith.constant 0 : i32
    %c0_i32_1 = arith.constant 0 : i32
    return %arg1, %c0_i32, %c0_i32_0 : i32, i32, i32
  }
  func.func @transform_11(%arg0: i32, %arg1: i32) -> (i32, i32, i32) {
    %c0_i32 = arith.constant 0 : i32
    %c0_i32_0 = arith.constant 0 : i32
    %c0_i32_1 = arith.constant 0 : i32
    return %arg1, %c0_i32, %c0_i32_0 : i32, i32, i32
  }
  func.func @transform_12(%arg0: i32, %arg1: i32) -> (i32, i32, i32) {
    %c0_i32 = arith.constant 0 : i32
    %c0_i32_0 = arith.constant 0 : i32
    %c0_i32_1 = arith.constant 0 : i32
    return %arg1, %c0_i32, %c0_i32_0 : i32, i32, i32
  }
  func.func @transform_13(%arg0: i32, %arg1: i32) -> (i32, i32, i32) {
    %c0_i32 = arith.constant 0 : i32
    %c0_i32_0 = arith.constant 0 : i32
    %c0_i32_1 = arith.constant 0 : i32
    return %arg0, %c0_i32, %c0_i32_0 : i32, i32, i32
  }
}

</mosaic_0001>

<llo_original>
// kernel: tpu_custom_call.1
$region0: #{tpu_custom_call.1}
  #allocation0 [shape = 'u32[]', space=smem, size = 0x4, offset = 0x4, fixed_abs, tag = 'smem constant byte address 0x4 - core index']
  #allocation1 [shape = 'u32[144,128]{1,0:T(1,128)}', space=vmem, size = 0x12000, scoped, tag = 'internal scratch']
  #allocation2 [shape = 'f32[16,32]{1,0:T(8,128)}', space=vmem, size = 0x2000, scoped, tag = 'scratch operand']
  %s0 = inlined_call_operand.vmem [shape: f32[2,8,32], index: 0, kind: input, shape index: {}]
  %s1 = inlined_call_operand.vmem [shape: f32[2,1,32], index: 1, kind: input, shape index: {}]
  %s2 = inlined_call_operand.vmem [shape: f32[2,1,32], index: 2, kind: input, shape index: {}]
  %s3 = inlined_call_operand.vmem [shape: bf16[2,32,96], index: 3, kind: input, shape index: {}]
  %s4 = inlined_call_operand.vmem [shape: f32[2,1,96], index: 4, kind: input, shape index: {}]
  %s5 = inlined_call_operand.vmem [shape: bf16[2,32,32], index: 5, kind: input, shape index: {}]
  %s6 = inlined_call_operand.vmem [shape: f32[2,1,32], index: 6, kind: input, shape index: {}]
  %s7 = inlined_call_operand.vmem [shape: f32[2,1,32], index: 7, kind: input, shape index: {}]
  %s8 = inlined_call_operand.vmem [shape: f32[2,1,32], index: 8, kind: input, shape index: {}]
  %s9 = inlined_call_operand.vmem [shape: bf16[2,32,128], index: 9, kind: input, shape index: {}]
  %s10 = inlined_call_operand.vmem [shape: f32[2,1,128], index: 10, kind: input, shape index: {}]
  %s11 = inlined_call_operand.vmem [shape: bf16[2,128,32], index: 11, kind: input, shape index: {}]
  %s12 = inlined_call_operand.vmem [shape: f32[2,1,32], index: 12, kind: input, shape index: {}]
  %s13 = inlined_call_operand.hbm [shape: f32[2,8,32], index: 13, kind: output, shape index: {}]
  %s14 = sld [smem:[#allocation0]]
  $region89: #{tpu_custom_call.1} parent=0
    _
  %s16 = ssub.s32 1, %s14
  %s17 = scalar_select 0, %s16, %s14
  $region1: #{tpu_custom_call.1} parent=0
    #allocation3 [shape = 'u8[8192]{0}', space=vmem, size = 0x2000, scoped, tag = 'output window, operand 0, single buffered']
    #allocation4 [shape = 's32[2]{0}', space=sflag, size = 0x8, scoped, tag = 'scoped memory for tpu_custom_call.1']
    %18 = vsyncpa [#allocation4], 0
    loop: start=0, step=1, limit=4
    $region2: #{tpu_custom_call.1} parent=1 // loop_pre_header
      _
    $region3: #{tpu_custom_call.1} parent=1 // loop_header
      %s20 = sphi 0, %s24
      %p21 = scmp.ge.s32.totalorder %s20, 4
      %s27 = sphi 0, %s39
      %s28 = sphi 0, %s35
      %s29 = sphi 0, %s27
      %s30 = sphi 0, %s28
      %s31 = sphi 0, %s29
      %s32 = sphi 0, %s30
      %s42 = sphi 0, %s44
      %s45 = sphi 0, %s42
      %s46 = sphi 0, %s45
      %s62 = sphi 0, %s46
      %s68 = sphi 0, %s70
      %s71 = sphi 0, %s68
      %s72 = sphi 0, %s71
      %s88 = sphi 0, %s72
      %s94 = sphi 0, %s96
      %s97 = sphi 0, %s94
      %s98 = sphi 0, %s97
      %s114 = sphi 0, %s98
      %s120 = sphi 0, %s122
      %s123 = sphi 0, %s120
      %s124 = sphi 0, %s123
      %s140 = sphi 0, %s124
      %s146 = sphi 0, %s148
      %s149 = sphi 0, %s146
      %s150 = sphi 0, %s149
      %s166 = sphi 0, %s150
      %s172 = sphi 0, %s174
      %s175 = sphi 0, %s172
      %s176 = sphi 0, %s175
      %s192 = sphi 0, %s176
      %s198 = sphi 0, %s200
      %s201 = sphi 0, %s198
      %s202 = sphi 0, %s201
      %s218 = sphi 0, %s202
      %s224 = sphi 0, %s226
      %s227 = sphi 0, %s224
      %s228 = sphi 0, %s227
      %s244 = sphi 0, %s228
      %s250 = sphi 0, %s252
      %s253 = sphi 0, %s250
      %s254 = sphi 0, %s253
      %s270 = sphi 0, %s254
      %s276 = sphi 0, %s278
      %s279 = sphi 0, %s276
      %s280 = sphi 0, %s279
      %s296 = sphi 0, %s280
      %s302 = sphi 0, %s304
      %s305 = sphi 0, %s302
      %s306 = sphi 0, %s305
      %s322 = sphi 0, %s306
      %s328 = sphi 0, %s330
      %s331 = sphi 0, %s328
      %s332 = sphi 0, %s331
      %s348 = sphi 0, %s332
      %s354 = sphi 0, %s356
      %s357 = sphi 0, %s354
      %s358 = sphi 0, %s357
      %s374 = sphi 0, %s358
      %s380 = sphi 0, %s382
      %s383 = sphi 0, %s380
      %s384 = sphi 0, %s383
      %s400 = sphi 0, %s384
    $region4: #{tpu_custom_call.1} parent=1 // loop_header_branch
      %23 = sbr.rel (%p21) target = $region8
    $region5: #{tpu_custom_call.1} parent=1 // loop_body
      %s25 = ssub.s32 %s20, 1
      %s26 = ssub.s32 %s20, 2
      %s33 = sadd.s32 1, %s28
      %p34 = scmp.ge.s32.totalorder %s33, 2
      %s35 = scalar_select %p34, 0, %s33
      %s36 = sadd.s32 1, %s27
      %s37 = scalar_select %p34, %s36, %s27
      %p38 = scmp.ge.s32.totalorder %s37, 1
      %s39 = scalar_select %p38, 0, %s37
      %s40 = ssub.s32 %s27, %s39
      %p41 = scmp.eq.s32.totalorder %s40, 0
      %s43 = sadd.s32 %s42, 1
      %s44 = scalar_select %p41, %s42, %s43
      %p47 = pneg %p41
      %p48 = scmp.eq.s32.totalorder %s20, 1
      %p49 = por %p47, %p48
      %p50 = scmp.ne.s32.totalorder %s42, %s45
      %p51 = scmp.eq.s32.totalorder %s20, 0
      %p52 = por %p50, %p51
      %p53 = scmp.ne.s32.totalorder %s42, %s45
      %p54 = scmp.eq.s32.totalorder %s25, 1
      %p55 = por %p53, %p54
      %p56 = scmp.ne.s32.totalorder %s45, %s46
      %p57 = scmp.eq.s32.totalorder %s25, 0
      %p58 = por %p56, %p57
      %p59 = scmp.ne.s32.totalorder %s45, %s46
      %p60 = scmp.eq.s32.totalorder %s26, 1
      %p61 = por %p59, %p60
      %p63 = scmp.ne.s32.totalorder %s46, %s62
      %p64 = scmp.eq.s32.totalorder %s26, 0
      %p65 = por %p63, %p64
      %s66 = ssub.s32 %s28, %s35
      %p67 = scmp.eq.s32.totalorder %s66, 0
      %s69 = sadd.s32 %s68, 1
      %s70 = scalar_select %p67, %s68, %s69
      %p73 = pneg %p67
      %p74 = scmp.eq.s32.totalorder %s20, 1
      %p75 = por %p73, %p74
      %p76 = scmp.ne.s32.totalorder %s68, %s71
      %p77 = scmp.eq.s32.totalorder %s20, 0
      %p78 = por %p76, %p77
      %p79 = scmp.ne.s32.totalorder %s68, %s71
      %p80 = scmp.eq.s32.totalorder %s25, 1
      %p81 = por %p79, %p80
      %p82 = scmp.ne.s32.totalorder %s71, %s72
      %p83 = scmp.eq.s32.totalorder %s25, 0
      %p84 = por %p82, %p83
      %p85 = scmp.ne.s32.totalorder %s71, %s72
      %p86 = scmp.eq.s32.totalorder %s26, 1
      %p87 = por %p85, %p86
      %p89 = scmp.ne.s32.totalorder %s72, %s88
      %p90 = scmp.eq.s32.totalorder %s26, 0
      %p91 = por %p89, %p90
      %s92 = ssub.s32 %s28, %s35
      %p93 = scmp.eq.s32.totalorder %s92, 0
      %s95 = sadd.s32 %s94, 1
      %s96 = scalar_select %p93, %s94, %s95
      %p99 = pneg %p93
      %p100 = scmp.eq.s32.totalorder %s20, 1
      %p101 = por %p99, %p100
      %p102 = scmp.ne.s32.totalorder %s94, %s97
      %p103 = scmp.eq.s32.totalorder %s20, 0
      %p104 = por %p102, %p103
      %p105 = scmp.ne.s32.totalorder %s94, %s97
      %p106 = scmp.eq.s32.totalorder %s25, 1
      %p107 = por %p105, %p106
      %p108 = scmp.ne.s32.totalorder %s97, %s98
      %p109 = scmp.eq.s32.totalorder %s25, 0
      %p110 = por %p108, %p109
      %p111 = scmp.ne.s32.totalorder %s97, %s98
      %p112 = scmp.eq.s32.totalorder %s26, 1
      %p113 = por %p111, %p112
      %p115 = scmp.ne.s32.totalorder %s98, %s114
      %p116 = scmp.eq.s32.totalorder %s26, 0
      %p117 = por %p115, %p116
      %s118 = ssub.s32 %s28, %s35
      %p119 = scmp.eq.s32.totalorder %s118, 0
      %s121 = sadd.s32 %s120, 1
      %s122 = scalar_select %p119, %s120, %s121
      %p125 = pneg %p119
      %p126 = scmp.eq.s32.totalorder %s20, 1
      %p127 = por %p125, %p126
      %p128 = scmp.ne.s32.totalorder %s120, %s123
      %p129 = scmp.eq.s32.totalorder %s20, 0
      %p130 = por %p128, %p129
      %p131 = scmp.ne.s32.totalorder %s120, %s123
      %p132 = scmp.eq.s32.totalorder %s25, 1
      %p133 = por %p131, %p132
      %p134 = scmp.ne.s32.totalorder %s123, %s124
      %p135 = scmp.eq.s32.totalorder %s25, 0
      %p136 = por %p134, %p135
      %p137 = scmp.ne.s32.totalorder %s123, %s124
      %p138 = scmp.eq.s32.totalorder %s26, 1
      %p139 = por %p137, %p138
      %p141 = scmp.ne.s32.totalorder %s124, %s140
      %p142 = scmp.eq.s32.totalorder %s26, 0
      %p143 = por %p141, %p142
      %s144 = ssub.s32 %s28, %s35
      %p145 = scmp.eq.s32.totalorder %s144, 0
      %s147 = sadd.s32 %s146, 1
      %s148 = scalar_select %p145, %s146, %s147
      %p151 = pneg %p145
      %p152 = scmp.eq.s32.totalorder %s20, 1
      %p153 = por %p151, %p152
      %p154 = scmp.ne.s32.totalorder %s146, %s149
      %p155 = scmp.eq.s32.totalorder %s20, 0
      %p156 = por %p154, %p155
      %p157 = scmp.ne.s32.totalorder %s146, %s149
      %p158 = scmp.eq.s32.totalorder %s25, 1
      %p159 = por %p157, %p158
      %p160 = scmp.ne.s32.totalorder %s149, %s150
      %p161 = scmp.eq.s32.totalorder %s25, 0
      %p162 = por %p160, %p161
      %p163 = scmp.ne.s32.totalorder %s149, %s150
      %p164 = scmp.eq.s32.totalorder %s26, 1
      %p165 = por %p163, %p164
      %p167 = scmp.ne.s32.totalorder %s150, %s166
      %p168 = scmp.eq.s32.totalorder %s26, 0
      %p169 = por %p167, %p168
      %s170 = ssub.s32 %s28, %s35
      %p171 = scmp.eq.s32.totalorder %s170, 0
      %s173 = sadd.s32 %s172, 1
      %s174 = scalar_select %p171, %s172, %s173
      %p177 = pneg %p171
      %p178 = scmp.eq.s32.totalorder %s20, 1
      %p179 = por %p177, %p178
      %p180 = scmp.ne.s32.totalorder %s172, %s175
      %p181 = scmp.eq.s32.totalorder %s20, 0
      %p182 = por %p180, %p181
      %p183 = scmp.ne.s32.totalorder %s172, %s175
      %p184 = scmp.eq.s32.totalorder %s25, 1
      %p185 = por %p183, %p184
      %p186 = scmp.ne.s32.totalorder %s175, %s176
      %p187 = scmp.eq.s32.totalorder %s25, 0
      %p188 = por %p186, %p187
      %p189 = scmp.ne.s32.totalorder %s175, %s176
      %p190 = scmp.eq.s32.totalorder %s26, 1
      %p191 = por %p189, %p190
      %p193 = scmp.ne.s32.totalorder %s176, %s192
      %p194 = scmp.eq.s32.totalorder %s26, 0
      %p195 = por %p193, %p194
      %s196 = ssub.s32 %s28, %s35
      %p197 = scmp.eq.s32.totalorder %s196, 0
      %s199 = sadd.s32 %s198, 1
      %s200 = scalar_select %p197, %s198, %s199
      %p203 = pneg %p197
      %p204 = scmp.eq.s32.totalorder %s20, 1
      %p205 = por %p203, %p204
      %p206 = scmp.ne.s32.totalorder %s198, %s201
      %p207 = scmp.eq.s32.totalorder %s20, 0
      %p208 = por %p206, %p207
      %p209 = scmp.ne.s32.totalorder %s198, %s201
      %p210 = scmp.eq.s32.totalorder %s25, 1
      %p211 = por %p209, %p210
      %p212 = scmp.ne.s32.totalorder %s201, %s202
      %p213 = scmp.eq.s32.totalorder %s25, 0
      %p214 = por %p212, %p213
      %p215 = scmp.ne.s32.totalorder %s201, %s202
      %p216 = scmp.eq.s32.totalorder %s26, 1
      %p217 = por %p215, %p216
      %p219 = scmp.ne.s32.totalorder %s202, %s218
      %p220 = scmp.eq.s32.totalorder %s26, 0
      %p221 = por %p219, %p220
      %s222 = ssub.s32 %s28, %s35
      %p223 = scmp.eq.s32.totalorder %s222, 0
      %s225 = sadd.s32 %s224, 1
      %s226 = scalar_select %p223, %s224, %s225
      %p229 = pneg %p223
      %p230 = scmp.eq.s32.totalorder %s20, 1
      %p231 = por %p229, %p230
      %p232 = scmp.ne.s32.totalorder %s224, %s227
      %p233 = scmp.eq.s32.totalorder %s20, 0
      %p234 = por %p232, %p233
      %p235 = scmp.ne.s32.totalorder %s224, %s227
      %p236 = scmp.eq.s32.totalorder %s25, 1
      %p237 = por %p235, %p236
      %p238 = scmp.ne.s32.totalorder %s227, %s228
      %p239 = scmp.eq.s32.totalorder %s25, 0
      %p240 = por %p238, %p239
      %p241 = scmp.ne.s32.totalorder %s227, %s228
      %p242 = scmp.eq.s32.totalorder %s26, 1
      %p243 = por %p241, %p242
      %p245 = scmp.ne.s32.totalorder %s228, %s244
      %p246 = scmp.eq.s32.totalorder %s26, 0
      %p247 = por %p245, %p246
      %s248 = ssub.s32 %s28, %s35
      %p249 = scmp.eq.s32.totalorder %s248, 0
      %s251 = sadd.s32 %s250, 1
      %s252 = scalar_select %p249, %s250, %s251
      %p255 = pneg %p249
      %p256 = scmp.eq.s32.totalorder %s20, 1
      %p257 = por %p255, %p256
      %p258 = scmp.ne.s32.totalorder %s250, %s253
      %p259 = scmp.eq.s32.totalorder %s20, 0
      %p260 = por %p258, %p259
      %p261 = scmp.ne.s32.totalorder %s250, %s253
      %p262 = scmp.eq.s32.totalorder %s25, 1
      %p263 = por %p261, %p262
      %p264 = scmp.ne.s32.totalorder %s253, %s254
      %p265 = scmp.eq.s32.totalorder %s25, 0
      %p266 = por %p264, %p265
      %p267 = scmp.ne.s32.totalorder %s253, %s254
      %p268 = scmp.eq.s32.totalorder %s26, 1
      %p269 = por %p267, %p268
      %p271 = scmp.ne.s32.totalorder %s254, %s270
      %p272 = scmp.eq.s32.totalorder %s26, 0
      %p273 = por %p271, %p272
      %s274 = ssub.s32 %s28, %s35
      %p275 = scmp.eq.s32.totalorder %s274, 0
      %s277 = sadd.s32 %s276, 1
      %s278 = scalar_select %p275, %s276, %s277
      %p281 = pneg %p275
      %p282 = scmp.eq.s32.totalorder %s20, 1
      %p283 = por %p281, %p282
      %p284 = scmp.ne.s32.totalorder %s276, %s279
      %p285 = scmp.eq.s32.totalorder %s20, 0
      %p286 = por %p284, %p285
      %p287 = scmp.ne.s32.totalorder %s276, %s279
      %p288 = scmp.eq.s32.totalorder %s25, 1
      %p289 = por %p287, %p288
      %p290 = scmp.ne.s32.totalorder %s279, %s280
      %p291 = scmp.eq.s32.totalorder %s25, 0
      %p292 = por %p290, %p291
      %p293 = scmp.ne.s32.totalorder %s279, %s280
      %p294 = scmp.eq.s32.totalorder %s26, 1
      %p295 = por %p293, %p294
      %p297 = scmp.ne.s32.totalorder %s280, %s296
      %p298 = scmp.eq.s32.totalorder %s26, 0
      %p299 = por %p297, %p298
      %s300 = ssub.s32 %s28, %s35
      %p301 = scmp.eq.s32.totalorder %s300, 0
      %s303 = sadd.s32 %s302, 1
      %s304 = scalar_select %p301, %s302, %s303
      %p307 = pneg %p301
      %p308 = scmp.eq.s32.totalorder %s20, 1
      %p309 = por %p307, %p308
      %p310 = scmp.ne.s32.totalorder %s302, %s305
      %p311 = scmp.eq.s32.totalorder %s20, 0
      %p312 = por %p310, %p311
      %p313 = scmp.ne.s32.totalorder %s302, %s305
      %p314 = scmp.eq.s32.totalorder %s25, 1
      %p315 = por %p313, %p314
      %p316 = scmp.ne.s32.totalorder %s305, %s306
      %p317 = scmp.eq.s32.totalorder %s25, 0
      %p318 = por %p316, %p317
      %p319 = scmp.ne.s32.totalorder %s305, %s306
      %p320 = scmp.eq.s32.totalorder %s26, 1
      %p321 = por %p319, %p320
      %p323 = scmp.ne.s32.totalorder %s306, %s322
      %p324 = scmp.eq.s32.totalorder %s26, 0
      %p325 = por %p323, %p324
      %s326 = ssub.s32 %s28, %s35
      %p327 = scmp.eq.s32.totalorder %s326, 0
      %s329 = sadd.s32 %s328, 1
      %s330 = scalar_select %p327, %s328, %s329
      %p333 = pneg %p327
      %p334 = scmp.eq.s32.totalorder %s20, 1
      %p335 = por %p333, %p334
      %p336 = scmp.ne.s32.totalorder %s328, %s331
      %p337 = scmp.eq.s32.totalorder %s20, 0
      %p338 = por %p336, %p337
      %p339 = scmp.ne.s32.totalorder %s328, %s331
      %p340 = scmp.eq.s32.totalorder %s25, 1
      %p341 = por %p339, %p340
      %p342 = scmp.ne.s32.totalorder %s331, %s332
      %p343 = scmp.eq.s32.totalorder %s25, 0
      %p344 = por %p342, %p343
      %p345 = scmp.ne.s32.totalorder %s331, %s332
      %p346 = scmp.eq.s32.totalorder %s26, 1
      %p347 = por %p345, %p346
      %p349 = scmp.ne.s32.totalorder %s332, %s348
      %p350 = scmp.eq.s32.totalorder %s26, 0
      %p351 = por %p349, %p350
      %s352 = ssub.s32 %s28, %s35
      %p353 = scmp.eq.s32.totalorder %s352, 0
      %s355 = sadd.s32 %s354, 1
      %s356 = scalar_select %p353, %s354, %s355
      %p359 = pneg %p353
      %p360 = scmp.eq.s32.totalorder %s20, 1
      %p361 = por %p359, %p360
      %p362 = scmp.ne.s32.totalorder %s354, %s357
      %p363 = scmp.eq.s32.totalorder %s20, 0
      %p364 = por %p362, %p363
      %p365 = scmp.ne.s32.totalorder %s354, %s357
      %p366 = scmp.eq.s32.totalorder %s25, 1
      %p367 = por %p365, %p366
      %p368 = scmp.ne.s32.totalorder %s357, %s358
      %p369 = scmp.eq.s32.totalorder %s25, 0
      %p370 = por %p368, %p369
      %p371 = scmp.ne.s32.totalorder %s357, %s358
      %p372 = scmp.eq.s32.totalorder %s26, 1
      %p373 = por %p371, %p372
      %p375 = scmp.ne.s32.totalorder %s358, %s374
      %p376 = scmp.eq.s32.totalorder %s26, 0
      %p377 = por %p375, %p376
      %s378 = ssub.s32 %s27, %s39
      %p379 = scmp.eq.s32.totalorder %s378, 0
      %s381 = sadd.s32 %s380, 1
      %s382 = scalar_select %p379, %s380, %s381
      %p385 = pneg %p379
      %p386 = scmp.eq.s32.totalorder %s20, 1
      %p387 = por %p385, %p386
      %p388 = scmp.ne.s32.totalorder %s380, %s383
      %p389 = scmp.eq.s32.totalorder %s20, 0
      %p390 = por %p388, %p389
      %p391 = scmp.ne.s32.totalorder %s380, %s383
      %p392 = scmp.eq.s32.totalorder %s25, 1
      %p393 = por %p391, %p392
      %p394 = scmp.ne.s32.totalorder %s383, %s384
      %p395 = scmp.eq.s32.totalorder %s25, 0
      %p396 = por %p394, %p395
      %p397 = scmp.ne.s32.totalorder %s383, %s384
      %p398 = scmp.eq.s32.totalorder %s26, 1
      %p399 = por %p397, %p398
      %p401 = scmp.ne.s32.totalorder %s384, %s400
      %p402 = scmp.eq.s32.totalorder %s26, 0
      %p403 = por %p401, %p402
      %p404 = scmp.le.s32.totalorder 1, %s20
      %p405 = scmp.lt.s32.totalorder %s20, 3
      %p406 = pnand %p404, %p405
      %p407 = pneg %p406
      // Predicated region
      $region9: #{tpu_custom_call.1} parent=5 // pred_check
        _
      $region10: #{tpu_custom_call.1} parent=5 // pred_check_branch
        %409 = sbr.rel (%p406) target = $region12
      $region11: #{tpu_custom_call.1} parent=5 // pred_region
        %s410 = ssub.s32 %s20, 1
        // Predicated region
        $region13: #{tpu_custom_call.1} parent=11 // pred_check
          %p411 = pneg %p58
        $region14: #{tpu_custom_call.1} parent=11 // pred_check_branch
          %413 = sbr.rel (%p411) target = $region16
        $region15: #{tpu_custom_call.1} parent=11 // pred_region
          %s414 = smul.u32 2, %s29
          %p415 = scmp.lt.s32.totalorder %s414, 1
          %s416 = scalar_select %p415, %s414, 1
          %s417 = smul.addr %s416, 8
          %s418 = scalar_lea.vmem %s0, %s417
          %s419 = smul.u32 2, %s29
        $region16: #{tpu_custom_call.1} parent=11 // pred_fallthru
          _
      $region12: #{tpu_custom_call.1} parent=5 // pred_fallthru
        _
      %p420 = scmp.lt.s32.totalorder %s20, 2
      // Predicated region
      $region17: #{tpu_custom_call.1} parent=5 // pred_check
        %p421 = pneg %p420
      $region18: #{tpu_custom_call.1} parent=5 // pred_check_branch
        %423 = sbr.rel (%p421) target = $region20
      $region19: #{tpu_custom_call.1} parent=5 // pred_region
        // Predicated region
        $region21: #{tpu_custom_call.1} parent=19 // pred_check
          %p424 = pneg %p78
        $region22: #{tpu_custom_call.1} parent=19 // pred_check_branch
          %426 = sbr.rel (%p424) target = $region24
        $region23: #{tpu_custom_call.1} parent=19 // pred_region
          %p427 = scmp.lt.s32.totalorder %s28, 1
          %s428 = scalar_select %p427, %s28, 1
          %s429 = scalar_lea.vmem %s1, %s428
        $region24: #{tpu_custom_call.1} parent=19 // pred_fallthru
          _
        // Predicated region
        $region25: #{tpu_custom_call.1} parent=19 // pred_check
          %p430 = pneg %p104
        $region26: #{tpu_custom_call.1} parent=19 // pred_check_branch
          %432 = sbr.rel (%p430) target = $region28
        $region27: #{tpu_custom_call.1} parent=19 // pred_region
          %p433 = scmp.lt.s32.totalorder %s28, 1
          %s434 = scalar_select %p433, %s28, 1
          %s435 = scalar_lea.vmem %s2, %s434
        $region28: #{tpu_custom_call.1} parent=19 // pred_fallthru
          _
        // Predicated region
        $region29: #{tpu_custom_call.1} parent=19 // pred_check
          %p436 = pneg %p130
        $region30: #{tpu_custom_call.1} parent=19 // pred_check_branch
          %438 = sbr.rel (%p436) target = $region32
        $region31: #{tpu_custom_call.1} parent=19 // pred_region
          %p439 = scmp.lt.s32.totalorder %s28, 1
          %s440 = scalar_select %p439, %s28, 1
          %s441 = smul.addr %s440, 4
          %s442 = smul.addr %s441, 4
          %s443 = scalar_lea.vmem %s3, %s442
        $region32: #{tpu_custom_call.1} parent=19 // pred_fallthru
          _
        // Predicated region
        $region33: #{tpu_custom_call.1} parent=19 // pred_check
          %p444 = pneg %p156
        $region34: #{tpu_custom_call.1} parent=19 // pred_check_branch
          %446 = sbr.rel (%p444) target = $region36
        $region35: #{tpu_custom_call.1} parent=19 // pred_region
          %p447 = scmp.lt.s32.totalorder %s28, 1
          %s448 = scalar_select %p447, %s28, 1
          %s449 = scalar_lea.vmem %s4, %s448
        $region36: #{tpu_custom_call.1} parent=19 // pred_fallthru
          _
        // Predicated region
        $region37: #{tpu_custom_call.1} parent=19 // pred_check
          %p450 = pneg %p182
        $region38: #{tpu_custom_call.1} parent=19 // pred_check_branch
          %452 = sbr.rel (%p450) target = $region40
        $region39: #{tpu_custom_call.1} parent=19 // pred_region
          %p453 = scmp.lt.s32.totalorder %s28, 1
          %s454 = scalar_select %p453, %s28, 1
          %s455 = smul.addr %s454, 4
          %s456 = smul.addr %s455, 4
          %s457 = scalar_lea.vmem %s5, %s456
        $region40: #{tpu_custom_call.1} parent=19 // pred_fallthru
          _
        // Predicated region
        $region41: #{tpu_custom_call.1} parent=19 // pred_check
          %p458 = pneg %p208
        $region42: #{tpu_custom_call.1} parent=19 // pred_check_branch
          %460 = sbr.rel (%p458) target = $region44
        $region43: #{tpu_custom_call.1} parent=19 // pred_region
          %p461 = scmp.lt.s32.totalorder %s28, 1
          %s462 = scalar_select %p461, %s28, 1
          %s463 = scalar_lea.vmem %s6, %s462
        $region44: #{tpu_custom_call.1} parent=19 // pred_fallthru
          _
        // Predicated region
        $region45: #{tpu_custom_call.1} parent=19 // pred_check
          %p464 = pneg %p234
        $region46: #{tpu_custom_call.1} parent=19 // pred_check_branch
          %466 = sbr.rel (%p464) target = $region48
        $region47: #{tpu_custom_call.1} parent=19 // pred_region
          %p467 = scmp.lt.s32.totalorder %s28, 1
          %s468 = scalar_select %p467, %s28, 1
          %s469 = scalar_lea.vmem %s7, %s468
        $region48: #{tpu_custom_call.1} parent=19 // pred_fallthru
          _
        // Predicated region
        $region49: #{tpu_custom_call.1} parent=19 // pred_check
          %p470 = pneg %p260
        $region50: #{tpu_custom_call.1} parent=19 // pred_check_branch
          %472 = sbr.rel (%p470) target = $region52
        $region51: #{tpu_custom_call.1} parent=19 // pred_region
          %p473 = scmp.lt.s32.totalorder %s28, 1
          %s474 = scalar_select %p473, %s28, 1
          %s475 = scalar_lea.vmem %s8, %s474
        $region52: #{tpu_custom_call.1} parent=19 // pred_fallthru
          _
        // Predicated region
        $region53: #{tpu_custom_call.1} parent=19 // pred_check
          %p476 = pneg %p286
        $region54: #{tpu_custom_call.1} parent=19 // pred_check_branch
          %478 = sbr.rel (%p476) target = $region56
        $region55: #{tpu_custom_call.1} parent=19 // pred_region
          %p479 = scmp.lt.s32.totalorder %s28, 1
          %s480 = scalar_select %p479, %s28, 1
          %s481 = smul.addr %s480, 4
          %s482 = smul.addr %s481, 4
          %s483 = scalar_lea.vmem %s9, %s482
        $region56: #{tpu_custom_call.1} parent=19 // pred_fallthru
          _
        // Predicated region
        $region57: #{tpu_custom_call.1} parent=19 // pred_check
          %p484 = pneg %p312
        $region58: #{tpu_custom_call.1} parent=19 // pred_check_branch
          %486 = sbr.rel (%p484) target = $region60
        $region59: #{tpu_custom_call.1} parent=19 // pred_region
          %p487 = scmp.lt.s32.totalorder %s28, 1
          %s488 = scalar_select %p487, %s28, 1
          %s489 = scalar_lea.vmem %s10, %s488
        $region60: #{tpu_custom_call.1} parent=19 // pred_fallthru
          _
        // Predicated region
        $region61: #{tpu_custom_call.1} parent=19 // pred_check
          %p490 = pneg %p338
        $region62: #{tpu_custom_call.1} parent=19 // pred_check_branch
          %492 = sbr.rel (%p490) target = $region64
        $region63: #{tpu_custom_call.1} parent=19 // pred_region
          %p493 = scmp.lt.s32.totalorder %s28, 1
          %s494 = scalar_select %p493, %s28, 1
          %s495 = smul.addr %s494, 16
          %s496 = smul.addr %s495, 4
          %s497 = scalar_lea.vmem %s11, %s496
        $region64: #{tpu_custom_call.1} parent=19 // pred_fallthru
          _
        // Predicated region
        $region65: #{tpu_custom_call.1} parent=19 // pred_check
          %p498 = pneg %p364
        $region66: #{tpu_custom_call.1} parent=19 // pred_check_branch
          %500 = sbr.rel (%p498) target = $region68
        $region67: #{tpu_custom_call.1} parent=19 // pred_region
          %p501 = scmp.lt.s32.totalorder %s28, 1
          %s502 = scalar_select %p501, %s28, 1
          %s503 = scalar_lea.vmem %s12, %s502
        $region68: #{tpu_custom_call.1} parent=19 // pred_fallthru
          _
      $region20: #{tpu_custom_call.1} parent=5 // pred_fallthru
        _
      %p504 = scmp.le.s32.totalorder 1, %s20
      %p505 = scmp.lt.s32.totalorder %s20, 3
      %p506 = pnand %p504, %p505
      %p507 = pneg %p506
      // Predicated region
      $region69: #{tpu_custom_call.1} parent=5 // pred_check
        _
      $region70: #{tpu_custom_call.1} parent=5 // pred_check_branch
        %509 = sbr.rel (%p506) target = $region72
      $region71: #{tpu_custom_call.1} parent=5 // pred_region
        %s510 = ssub.s32 %s20, 1
        %s511 = smul.u32 2, %s29
        %p512 = scmp.lt.s32.totalorder %s511, 1
        %s513 = scalar_select %p512, %s511, 1
        %s514 = smul.addr %s513, 8
        %s515 = scalar_lea.vmem %s0, %s514
        %p516 = pneg %p58
        %p517 = pneg %p55
        %p518 = scmp.lt.s32.totalorder %s30, 1
        %s519 = scalar_select %p518, %s30, 1
        %s520 = scalar_lea.vmem %s1, %s519
        %p521 = pneg %p84
        %p522 = pneg %p81
        %p523 = scmp.lt.s32.totalorder %s30, 1
        %s524 = scalar_select %p523, %s30, 1
        %s525 = scalar_lea.vmem %s2, %s524
        %p526 = pneg %p110
        %p527 = pneg %p107
        %p528 = scmp.lt.s32.totalorder %s30, 1
        %s529 = scalar_select %p528, %s30, 1
        %s530 = smul.addr %s529, 4
        %s531 = smul.addr %s530, 4
        %s532 = scalar_lea.vmem %s3, %s531
        %p533 = pneg %p136
        %p534 = pneg %p133
        %p535 = scmp.lt.s32.totalorder %s30, 1
        %s536 = scalar_select %p535, %s30, 1
        %s537 = scalar_lea.vmem %s4, %s536
        %p538 = pneg %p162
        %p539 = pneg %p159
        %p540 = scmp.lt.s32.totalorder %s30, 1
        %s541 = scalar_select %p540, %s30, 1
        %s542 = smul.addr %s541, 4
        %s543 = smul.addr %s542, 4
        %s544 = scalar_lea.vmem %s5, %s543
        %p545 = pneg %p188
        %p546 = pneg %p185
        %p547 = scmp.lt.s32.totalorder %s30, 1
        %s548 = scalar_select %p547, %s30, 1
        %s549 = scalar_lea.vmem %s6, %s548
        %p550 = pneg %p214
        %p551 = pneg %p211
        %p552 = scmp.lt.s32.totalorder %s30, 1
        %s553 = scalar_select %p552, %s30, 1
        %s554 = scalar_lea.vmem %s7, %s553
        %p555 = pneg %p240
        %p556 = pneg %p237
        %p557 = scmp.lt.s32.totalorder %s30, 1
        %s558 = scalar_select %p557, %s30, 1
        %s559 = scalar_lea.vmem %s8, %s558
        %p560 = pneg %p266
        %p561 = pneg %p263
        %p562 = scmp.lt.s32.totalorder %s30, 1
        %s563 = scalar_select %p562, %s30, 1
        %s564 = smul.addr %s563, 4
        %s565 = smul.addr %s564, 4
        %s566 = scalar_lea.vmem %s9, %s565
        %p567 = pneg %p292
        %p568 = pneg %p289
        %p569 = scmp.lt.s32.totalorder %s30, 1
        %s570 = scalar_select %p569, %s30, 1
        %s571 = scalar_lea.vmem %s10, %s570
        %p572 = pneg %p318
        %p573 = pneg %p315
        %p574 = scmp.lt.s32.totalorder %s30, 1
        %s575 = scalar_select %p574, %s30, 1
        %s576 = smul.addr %s575, 16
        %s577 = smul.addr %s576, 4
        %s578 = scalar_lea.vmem %s11, %s577
        %p579 = pneg %p344
        %p580 = pneg %p341
        %p581 = scmp.lt.s32.totalorder %s30, 1
        %s582 = scalar_select %p581, %s30, 1
        %s583 = scalar_lea.vmem %s12, %s582
        %p584 = pneg %p370
        %p585 = pneg %p367
        %p586 = pneg %p396
        %p587 = pneg %p393
        %s588 = smul.u32 2, %s29
        %p589 = scmp.lt.s32.totalorder %s588, 1
        %s590 = scalar_select %p589, %s588, 1
        %s591 = smul.addr %s590, 8
        %s592 = scalar_lea.vmem %s0, %s591
        %s593 = smul.u32 2, %s29
        %p594 = scmp.lt.s32.totalorder %s30, 1
        %s595 = scalar_select %p594, %s30, 1
        %s596 = scalar_lea.vmem %s1, %s595
        %p597 = scmp.lt.s32.totalorder %s30, 1
        %s598 = scalar_select %p597, %s30, 1
        %s599 = scalar_lea.vmem %s2, %s598
        %p600 = scmp.lt.s32.totalorder %s30, 1
        %s601 = scalar_select %p600, %s30, 1
        %s602 = smul.addr %s601, 4
        %s603 = smul.addr %s602, 4
        %s604 = scalar_lea.vmem %s3, %s603
        %p605 = scmp.lt.s32.totalorder %s30, 1
        %s606 = scalar_select %p605, %s30, 1
        %s607 = scalar_lea.vmem %s4, %s606
        %p608 = scmp.lt.s32.totalorder %s30, 1
        %s609 = scalar_select %p608, %s30, 1
        %s610 = smul.addr %s609, 4
        %s611 = smul.addr %s610, 4
        %s612 = scalar_lea.vmem %s5, %s611
        %p613 = scmp.lt.s32.totalorder %s30, 1
        %s614 = scalar_select %p613, %s30, 1
        %s615 = scalar_lea.vmem %s6, %s614
        %p616 = scmp.lt.s32.totalorder %s30, 1
        %s617 = scalar_select %p616, %s30, 1
        %s618 = scalar_lea.vmem %s7, %s617
        %p619 = scmp.lt.s32.totalorder %s30, 1
        %s620 = scalar_select %p619, %s30, 1
        %s621 = scalar_lea.vmem %s8, %s620
        %p622 = scmp.lt.s32.totalorder %s30, 1
        %s623 = scalar_select %p622, %s30, 1
        %s624 = smul.addr %s623, 4
        %s625 = smul.addr %s624, 4
        %s626 = scalar_lea.vmem %s9, %s625
        %p627 = scmp.lt.s32.totalorder %s30, 1
        %s628 = scalar_select %p627, %s30, 1
        %s629 = scalar_lea.vmem %s10, %s628
        %p630 = scmp.lt.s32.totalorder %s30, 1
        %s631 = scalar_select %p630, %s30, 1
        %s632 = smul.addr %s631, 16
        %s633 = smul.addr %s632, 4
        %s634 = scalar_lea.vmem %s11, %s633
        %p635 = scmp.lt.s32.totalorder %s30, 1
        %s636 = scalar_select %p635, %s30, 1
        %s637 = scalar_lea.vmem %s12, %s636
        %s638 = smul.u32 2, %s29
        %p640 = scmp.eq.s32.totalorder %s30, 0
        // Predicated region
        $region73: #{tpu_custom_call.1} parent=71 // pred_check
          %p641 = pneg %p640
        $region74: #{tpu_custom_call.1} parent=71 // pred_check_branch
          %643 = sbr.rel (%p641) target = $region76
        $region75: #{tpu_custom_call.1} parent=71 // pred_region
          %v644 = vld [vmem:[%s592] sm:$0xff]
          %v645 = vld [vmem:[%s592 + $0x8] sm:$0xff]
          %vm646 = vcmask 261120
          %647 = vst.msk [vmem:[#allocation3] sm:$0xff] %vm646, %v644
          %648 = vst.msk [vmem:[#allocation3 + $0x8] sm:$0xff] %vm646, %v645
        $region76: #{tpu_custom_call.1} parent=71 // pred_fallthru
          _
        %v649 = vld [vmem:[#allocation3] sm:$0xff]
        %v650 = vld [vmem:[#allocation3 + $0x8] sm:$0xff]
        %vm651 = vcmask 261120
        %v652 = vsel %vm651, %v649, 0.0
        %653 = vadd.xlane.f32.xlu0 %v652
        %v654 = vpop.xlane.xlu0 %653
        %v655 = vsel %vm651, %v650, 0.0
        %656 = vadd.xlane.f32.xlu0 %v655
        %v657 = vpop.xlane.xlu0 %656
        %v658 = vrcp.pop 32.0
        %v659 = vmul.f32 %v654, %v658
        %v660 = vmul.f32 %v657, %v658
        %v661 = vsub.f32 %v649, %v659
        %v662 = vsub.f32 %v650, %v660
        %v663 = vmul.f32 %v661, %v661
        %v664 = vmul.f32 %v662, %v662
        %v665 = vsel %vm651, %v663, 0.0
        %666 = vadd.xlane.f32.xlu0 %v665
        %v667 = vpop.xlane.xlu0 %666
        %v668 = vsel %vm651, %v664, 0.0
        %669 = vadd.xlane.f32.xlu0 %v668
        %v670 = vpop.xlane.xlu0 %669
        %v671 = vmul.f32 %v667, %v658
        %v672 = vmul.f32 %v670, %v658
        %v673 = vadd.f32 %v671, 1e-05
        %v674 = vadd.f32 %v672, 1e-05
        %v675 = vrsqrt.pop %v673
        %v676 = vrsqrt.pop %v674
        %v677 = vmul.f32 %v661, %v675
        %v678 = vmul.f32 %v662, %v676
        %v679 = vld [vmem:[%s596] sm:$0x1]
        %v681 = vlaneseq
        %v682 = vshrl.u32 %v681, 7
        %v683 = vsub.s32 0, %v682
        %v684 = vrot.slane %v679, %v683
        %v686 = vmul.f32 %v677, %v684
        %v687 = vmul.f32 %v678, %v684
        %v688 = vld [vmem:[%s599] sm:$0x1]
        %v690 = vlaneseq
        %v691 = vshrl.u32 %v690, 7
        %v692 = vsub.s32 0, %v691
        %v693 = vrot.slane %v688, %v692
        %v695 = vadd.f32 %v686, %v693
        %v696 = vadd.f32 %v687, %v693
        %v697 = vpack.c.bf16 %v696, %v695
        %v698 = vld [vmem:[%s604] sm:$0xf]
        %v699 = vld [vmem:[%s604 + $0x4] sm:$0xf]
        %v700 = vld [vmem:[%s604 + $0x8] sm:$0xf]
        %v701 = vld [vmem:[%s604 + $0xc] sm:$0xf]
        %v702 = vld [vmem:[%s607] sm:$0x1]
        %v704 = vlaneseq
        %v705 = vshrl.u32 %v704, 7
        %v706 = vsub.s32 0, %v705
        %v707 = vrot.slane %v702, %v706
        %v713 = vunpack.c.l.b16 %v698
        %v714 = vunpack.c.l.b16 %v699
        %v715 = vunpack.c.l.b16 %v700
        %v716 = vunpack.c.l.b16 %v701
        %v717 = vpack.c.b16 %v714, %v713
        %v718 = vpack.c.b16 %v716, %v715
        %v722 = vsel %vm651, %v697, 0
        %724 = vmatprep.subr.bf16.mxu0 0
        %725 = vmatpush1.bf16.msra.mxu0 %v717
        %726 = vmatprep.subr.bf16.mxu0 0
        %727 = vmatpush1.bf16.msra.mxu0 %v718
        %728 = vmatprep.subr.bf16.mxu0 0
        %729 = vmatpush1.bf16.msra.mxu0 0
        %730 = vmatprep.subr.bf16.mxu0 0
        %731 = vmatpush1.bf16.msra.mxu0 0
        %732 = vmatprep.subr.bf16.mxu0 0
        %733 = vmatpush1.bf16.msra.mxu0 0
        %734 = vmatprep.subr.bf16.mxu0 0
        %735 = vmatpush1.bf16.msra.mxu0 0
        %736 = vmatprep.subr.bf16.mxu0 0
        %737 = vmatpush1.bf16.msra.mxu0 0
        %738 = vmatprep.subr.bf16.mxu0 0
        %739 = vmatpush1.bf16.msra.mxu0 0
        %740 = vmatprep.subr.bf16.mxu0 0
        %741 = vmatpush1.bf16.msra.mxu0 0
        %742 = vmatprep.subr.bf16.mxu0 0
        %743 = vmatpush1.bf16.msra.mxu0 0
        %744 = vmatprep.subr.bf16.mxu0 0
        %745 = vmatpush1.bf16.msra.mxu0 0
        %746 = vmatprep.subr.bf16.mxu0 0
        %747 = vmatpush1.bf16.msra.mxu0 0
        %748 = vmatprep.subr.bf16.mxu0 0
        %749 = vmatpush1.bf16.msra.mxu0 0
        %750 = vmatprep.subr.bf16.mxu0 0
        %751 = vmatpush1.bf16.msra.mxu0 0
        %752 = vmatprep.subr.bf16.mxu0 0
        %753 = vmatpush1.bf16.msra.mxu0 0
        %754 = vmatprep.subr.bf16.mxu0 0
        %755 = vmatpush1.bf16.msra.mxu0 0
        %756 = vmatprep.mubr.bf16.mxu0 0
        %757 = vmatmul.mubr.bf16.gmra.mrb[0].mxu0 %v722
        %v758 = vpop.f32.mrb[0].mxu0
        %v759 = vadd.f32 %v707, %v758
        %v760 = vpop.f32.mrb[0].mxu0
        %v761 = vpop.f32.mrb[0].mxu0
        %v762 = vadd.f32 %v707, %v761
        %v763 = vpop.f32.mrb[0].mxu0
        %764 = vdwg.mxu0
        %v765 = vpack.c.bf16 %v759, %v759
        %v766 = vpack.c.bf16 %v762, %v762
        %768 = vrot.lane.b32.xlu0 %v765, 96
        %v769 = vpop.permute.xlu0 %768
        %vm770 = vcmask 64512
        %v772 = vsel %vm770, %v765, 0
        %v775 = vsel %vm770, %v769, 0
        %777 = vmatprep.subr.bf16.mxu0 0
        %778 = vmatpush1.bf16.xpose.msra.mxu0 %v775
        %779 = vmatprep.subr.bf16.mxu0 0
        %780 = vmatpush1.bf16.xpose.msra.mxu0 0
        %781 = vmatprep.subr.bf16.mxu0 0
        %782 = vmatpush1.bf16.xpose.msra.mxu0 0
        %783 = vmatprep.subr.bf16.mxu0 0
        %784 = vmatpush1.bf16.xpose.msra.mxu0 0
        %785 = vmatprep.subr.bf16.mxu0 0
        %786 = vmatpush1.bf16.xpose.msra.mxu0 0
        %787 = vmatprep.subr.bf16.mxu0 0
        %788 = vmatpush1.bf16.xpose.msra.mxu0 0
        %789 = vmatprep.subr.bf16.mxu0 0
        %790 = vmatpush1.bf16.xpose.msra.mxu0 0
        %791 = vmatprep.subr.bf16.mxu0 0
        %792 = vmatpush1.bf16.xpose.msra.mxu0 0
        %793 = vmatprep.subr.bf16.mxu0 0
        %794 = vmatpush1.bf16.xpose.msra.mxu0 0
        %795 = vmatprep.subr.bf16.mxu0 0
        %796 = vmatpush1.bf16.xpose.msra.mxu0 0
        %797 = vmatprep.subr.bf16.mxu0 0
        %798 = vmatpush1.bf16.xpose.msra.mxu0 0
        %799 = vmatprep.subr.bf16.mxu0 0
        %800 = vmatpush1.bf16.xpose.msra.mxu0 0
        %801 = vmatprep.subr.bf16.mxu0 0
        %802 = vmatpush1.bf16.xpose.msra.mxu0 0
        %803 = vmatprep.subr.bf16.mxu0 0
        %804 = vmatpush1.bf16.xpose.msra.mxu0 0
        %805 = vmatprep.subr.bf16.mxu0 0
        %806 = vmatpush1.bf16.xpose.msra.mxu0 0
        %807 = vmatprep.subr.bf16.mxu0 0
        %808 = vmatpush1.bf16.xpose.msra.mxu0 0
        %809 = vmatprep.mubr.bf16.mxu0 0
        %810 = vmatmul.mubr.bf16.gmra.mrb[0].mxu0 %v772
        %v811 = vpop.f32.mrb[0].mxu0
        %v812 = vadd.f32 0.0, %v811
        %v813 = vpop.f32.mrb[0].mxu0
        %v814 = vpop.f32.mrb[0].mxu0
        %v815 = vpop.f32.mrb[0].mxu0
        %816 = vdwg.mxu0
        %818 = vrot.lane.b32.xlu0 %v766, 96
        %v819 = vpop.permute.xlu0 %818
        %v821 = vsel %vm770, %v766, 0
        %v824 = vsel %vm770, %v819, 0
        %826 = vmatprep.subr.bf16.mxu0 0
        %827 = vmatpush1.bf16.xpose.msra.mxu0 %v824
        %828 = vmatprep.subr.bf16.mxu0 0
        %829 = vmatpush1.bf16.xpose.msra.mxu0 0
        %830 = vmatprep.subr.bf16.mxu0 0
        %831 = vmatpush1.bf16.xpose.msra.mxu0 0
        %832 = vmatprep.subr.bf16.mxu0 0
        %833 = vmatpush1.bf16.xpose.msra.mxu0 0
        %834 = vmatprep.subr.bf16.mxu0 0
        %835 = vmatpush1.bf16.xpose.msra.mxu0 0
        %836 = vmatprep.subr.bf16.mxu0 0
        %837 = vmatpush1.bf16.xpose.msra.mxu0 0
        %838 = vmatprep.subr.bf16.mxu0 0
        %839 = vmatpush1.bf16.xpose.msra.mxu0 0
        %840 = vmatprep.subr.bf16.mxu0 0
        %841 = vmatpush1.bf16.xpose.msra.mxu0 0
        %842 = vmatprep.subr.bf16.mxu0 0
        %843 = vmatpush1.bf16.xpose.msra.mxu0 0
        %844 = vmatprep.subr.bf16.mxu0 0
        %845 = vmatpush1.bf16.xpose.msra.mxu0 0
        %846 = vmatprep.subr.bf16.mxu0 0
        %847 = vmatpush1.bf16.xpose.msra.mxu0 0
        %848 = vmatprep.subr.bf16.mxu0 0
        %849 = vmatpush1.bf16.xpose.msra.mxu0 0
        %850 = vmatprep.subr.bf16.mxu0 0
        %851 = vmatpush1.bf16.xpose.msra.mxu0 0
        %852 = vmatprep.subr.bf16.mxu0 0
        %853 = vmatpush1.bf16.xpose.msra.mxu0 0
        %854 = vmatprep.subr.bf16.mxu0 0
        %855 = vmatpush1.bf16.xpose.msra.mxu0 0
        %856 = vmatprep.subr.bf16.mxu0 0
        %857 = vmatpush1.bf16.xpose.msra.mxu0 0
        %858 = vmatprep.mubr.bf16.mxu0 0
        %859 = vmatmul.mubr.bf16.gmra.mrb[0].mxu0 %v821
        %v860 = vpop.f32.mrb[0].mxu0
        %v861 = vadd.f32 0.0, %v860
        %v862 = vpop.f32.mrb[0].mxu0
        %v863 = vpop.f32.mrb[0].mxu0
        %v864 = vpop.f32.mrb[0].mxu0
        %865 = vdwg.mxu0
        %v866 = vsel %vm770, %v812, -inf
        %867 = vmax.xlane.f32.xlu0 %v866
        %v868 = vpop.xlane.xlu0 %867
        %v869 = vsel %vm770, %v861, -inf
        %870 = vmax.xlane.f32.xlu0 %v869
        %v871 = vpop.xlane.xlu0 %870
        %v872 = vsub.f32 %v812, %v868
        %v873 = vsub.f32 %v861, %v871
        %v874 = vmul.f32 %v872, 1.442695
        %v875 = vpow.pop %v874
        %v876 = vmul.f32 %v873, 1.442695
        %v877 = vpow.pop %v876
        %v878 = vsel %vm770, %v875, 0.0
        %879 = vadd.xlane.f32.xlu0 %v878
        %v880 = vpop.xlane.xlu0 %879
        %v881 = vsel %vm770, %v877, 0.0
        %882 = vadd.xlane.f32.xlu0 %v881
        %v883 = vpop.xlane.xlu0 %882
        %v884 = vrcp.pop %v880
        %v885 = vrcp.pop %v883
        %v886 = vmul.f32 %v875, %v884
        %v887 = vmul.f32 %v877, %v885
        %v888 = vpack.c.bf16 %v886, %v886
        %v889 = vpack.c.bf16 %v887, %v887
        %890 = vrot.lane.b32.xlu0 %v765, 64
        %v891 = vpop.permute.xlu0 %890
        %v893 = vsel %vm770, %v888, 0
        %vm895 = vcmask 1043456
        %v897 = vsel %vm895, %v891, 0
        %899 = vmatprep.subr.bf16.mxu0 0
        %900 = vmatpush1.bf16.msra.mxu0 %v897
        %901 = vmatprep.subr.bf16.mxu0 0
        %902 = vmatpush1.bf16.msra.mxu0 0
        %903 = vmatprep.subr.bf16.mxu0 0
        %904 = vmatpush1.bf16.msra.mxu0 0
        %905 = vmatprep.subr.bf16.mxu0 0
        %906 = vmatpush1.bf16.msra.mxu0 0
        %907 = vmatprep.subr.bf16.mxu0 0
        %908 = vmatpush1.bf16.msra.mxu0 0
        %909 = vmatprep.subr.bf16.mxu0 0
        %910 = vmatpush1.bf16.msra.mxu0 0
        %911 = vmatprep.subr.bf16.mxu0 0
        %912 = vmatpush1.bf16.msra.mxu0 0
        %913 = vmatprep.subr.bf16.mxu0 0
        %914 = vmatpush1.bf16.msra.mxu0 0
        %915 = vmatprep.subr.bf16.mxu0 0
        %916 = vmatpush1.bf16.msra.mxu0 0
        %917 = vmatprep.subr.bf16.mxu0 0
        %918 = vmatpush1.bf16.msra.mxu0 0
        %919 = vmatprep.subr.bf16.mxu0 0
        %920 = vmatpush1.bf16.msra.mxu0 0
        %921 = vmatprep.subr.bf16.mxu0 0
        %922 = vmatpush1.bf16.msra.mxu0 0
        %923 = vmatprep.subr.bf16.mxu0 0
        %924 = vmatpush1.bf16.msra.mxu0 0
        %925 = vmatprep.subr.bf16.mxu0 0
        %926 = vmatpush1.bf16.msra.mxu0 0
        %927 = vmatprep.subr.bf16.mxu0 0
        %928 = vmatpush1.bf16.msra.mxu0 0
        %929 = vmatprep.subr.bf16.mxu0 0
        %930 = vmatpush1.bf16.msra.mxu0 0
        %931 = vmatprep.mubr.bf16.mxu0 0
        %932 = vmatmul.mubr.bf16.gmra.mrb[0].mxu0 %v893
        %v933 = vpop.f32.mrb[0].mxu0
        %v934 = vadd.f32 0.0, %v933
        %v935 = vpop.f32.mrb[0].mxu0
        %v936 = vpop.f32.mrb[0].mxu0
        %v937 = vpop.f32.mrb[0].mxu0
        %938 = vdwg.mxu0
        %939 = vrot.lane.b32.xlu0 %v766, 64
        %v940 = vpop.permute.xlu0 %939
        %v942 = vsel %vm770, %v889, 0
        %v945 = vsel %vm895, %v940, 0
        %947 = vmatprep.subr.bf16.mxu0 0
        %948 = vmatpush1.bf16.msra.mxu0 %v945
        %949 = vmatprep.subr.bf16.mxu0 0
        %950 = vmatpush1.bf16.msra.mxu0 0
        %951 = vmatprep.subr.bf16.mxu0 0
        %952 = vmatpush1.bf16.msra.mxu0 0
        %953 = vmatprep.subr.bf16.mxu0 0
        %954 = vmatpush1.bf16.msra.mxu0 0
        %955 = vmatprep.subr.bf16.mxu0 0
        %956 = vmatpush1.bf16.msra.mxu0 0
        %957 = vmatprep.subr.bf16.mxu0 0
        %958 = vmatpush1.bf16.msra.mxu0 0
        %959 = vmatprep.subr.bf16.mxu0 0
        %960 = vmatpush1.bf16.msra.mxu0 0
        %961 = vmatprep.subr.bf16.mxu0 0
        %962 = vmatpush1.bf16.msra.mxu0 0
        %963 = vmatprep.subr.bf16.mxu0 0
        %964 = vmatpush1.bf16.msra.mxu0 0
        %965 = vmatprep.subr.bf16.mxu0 0
        %966 = vmatpush1.bf16.msra.mxu0 0
        %967 = vmatprep.subr.bf16.mxu0 0
        %968 = vmatpush1.bf16.msra.mxu0 0
        %969 = vmatprep.subr.bf16.mxu0 0
        %970 = vmatpush1.bf16.msra.mxu0 0
        %971 = vmatprep.subr.bf16.mxu0 0
        %972 = vmatpush1.bf16.msra.mxu0 0
        %973 = vmatprep.subr.bf16.mxu0 0
        %974 = vmatpush1.bf16.msra.mxu0 0
        %975 = vmatprep.subr.bf16.mxu0 0
        %976 = vmatpush1.bf16.msra.mxu0 0
        %977 = vmatprep.subr.bf16.mxu0 0
        %978 = vmatpush1.bf16.msra.mxu0 0
        %979 = vmatprep.mubr.bf16.mxu0 0
        %980 = vmatmul.mubr.bf16.gmra.mrb[0].mxu0 %v942
        %v981 = vpop.f32.mrb[0].mxu0
        %v982 = vadd.f32 0.0, %v981
        %v983 = vpop.f32.mrb[0].mxu0
        %v984 = vpop.f32.mrb[0].mxu0
        %v985 = vpop.f32.mrb[0].mxu0
        %986 = vdwg.mxu0
        %987 = vst.msk [vmem:[#allocation2] sm:$0xff] %vm770, %v934
        %988 = vst.msk [vmem:[#allocation2 + $0x8] sm:$0xff] %vm770, %v982
        %989 = vrot.lane.b32.xlu0 %v765, 120
        %v990 = vpop.permute.xlu0 %989
        %991 = vrot.lane.b32.xlu0 %v765, 88
        %v992 = vpop.permute.xlu0 %991
        %v994 = vsel %vm770, %v990, 0
        %v997 = vsel %vm770, %v992, 0
        %999 = vmatprep.subr.bf16.mxu0 0
        %1000 = vmatpush1.bf16.xpose.msra.mxu0 %v997
        %1001 = vmatprep.subr.bf16.mxu0 0
        %1002 = vmatpush1.bf16.xpose.msra.mxu0 0
        %1003 = vmatprep.subr.bf16.mxu0 0
        %1004 = vmatpush1.bf16.xpose.msra.mxu0 0
        %1005 = vmatprep.subr.bf16.mxu0 0
        %1006 = vmatpush1.bf16.xpose.msra.mxu0 0
        %1007 = vmatprep.subr.bf16.mxu0 0
        %1008 = vmatpush1.bf16.xpose.msra.mxu0 0
        %1009 = vmatprep.subr.bf16.mxu0 0
        %1010 = vmatpush1.bf16.xpose.msra.mxu0 0
        %1011 = vmatprep.subr.bf16.mxu0 0
        %1012 = vmatpush1.bf16.xpose.msra.mxu0 0
        %1013 = vmatprep.subr.bf16.mxu0 0
        %1014 = vmatpush1.bf16.xpose.msra.mxu0 0
        %1015 = vmatprep.subr.bf16.mxu0 0
        %1016 = vmatpush1.bf16.xpose.msra.mxu0 0
        %1017 = vmatprep.subr.bf16.mxu0 0
        %1018 = vmatpush1.bf16.xpose.msra.mxu0 0
        %1019 = vmatprep.subr.bf16.mxu0 0
        %1020 = vmatpush1.bf16.xpose.msra.mxu0 0
        %1021 = vmatprep.subr.bf16.mxu0 0
        %1022 = vmatpush1.bf16.xpose.msra.mxu0 0
        %1023 = vmatprep.subr.bf16.mxu0 0
        %1024 = vmatpush1.bf16.xpose.msra.mxu0 0
        %1025 = vmatprep.subr.bf16.mxu0 0
        %1026 = vmatpush1.bf16.xpose.msra.mxu0 0
        %1027 = vmatprep.subr.bf16.mxu0 0
        %1028 = vmatpush1.bf16.xpose.msra.mxu0 0
        %1029 = vmatprep.subr.bf16.mxu0 0
        %1030 = vmatpush1.bf16.xpose.msra.mxu0 0
        %1031 = vmatprep.mubr.bf16.mxu0 0
        %1032 = vmatmul.mubr.bf16.gmra.mrb[0].mxu0 %v994
        %v1033 = vpop.f32.mrb[0].mxu0
        %v1034 = vadd.f32 0.0, %v1033
        %v1035 = vpop.f32.mrb[0].mxu0
        %v1036 = vpop.f32.mrb[0].mxu0
        %v1037 = vpop.f32.mrb[0].mxu0
        %1038 = vdwg.mxu0
        %1039 = vrot.lane.b32.xlu0 %v766, 120
        %v1040 = vpop.permute.xlu0 %1039
        %1041 = vrot.lane.b32.xlu0 %v766, 88
        %v1042 = vpop.permute.xlu0 %1041
        %v1044 = vsel %vm770, %v1040, 0
        %v1047 = vsel %vm770, %v1042, 0
        %1049 = vmatprep.subr.bf16.mxu0 0
        %1050 = vmatpush1.bf16.xpose.msra.mxu0 %v1047
        %1051 = vmatprep.subr.bf16.mxu0 0
        %1052 = vmatpush1.bf16.xpose.msra.mxu0 0
        %1053 = vmatprep.subr.bf16.mxu0 0
        %1054 = vmatpush1.bf16.xpose.msra.mxu0 0
        %1055 = vmatprep.subr.bf16.mxu0 0
        %1056 = vmatpush1.bf16.xpose.msra.mxu0 0
        %1057 = vmatprep.subr.bf16.mxu0 0
        %1058 = vmatpush1.bf16.xpose.msra.mxu0 0
        %1059 = vmatprep.subr.bf16.mxu0 0
        %1060 = vmatpush1.bf16.xpose.msra.mxu0 0
        %1061 = vmatprep.subr.bf16.mxu0 0
        %1062 = vmatpush1.bf16.xpose.msra.mxu0 0
        %1063 = vmatprep.subr.bf16.mxu0 0
        %1064 = vmatpush1.bf16.xpose.msra.mxu0 0
        %1065 = vmatprep.subr.bf16.mxu0 0
        %1066 = vmatpush1.bf16.xpose.msra.mxu0 0
        %1067 = vmatprep.subr.bf16.mxu0 0
        %1068 = vmatpush1.bf16.xpose.msra.mxu0 0
        %1069 = vmatprep.subr.bf16.mxu0 0
        %1070 = vmatpush1.bf16.xpose.msra.mxu0 0
        %1071 = vmatprep.subr.bf16.mxu0 0
        %1072 = vmatpush1.bf16.xpose.msra.mxu0 0
        %1073 = vmatprep.subr.bf16.mxu0 0
        %1074 = vmatpush1.bf16.xpose.msra.mxu0 0
        %1075 = vmatprep.subr.bf16.mxu0 0
        %1076 = vmatpush1.bf16.xpose.msra.mxu0 0
        %1077 = vmatprep.subr.bf16.mxu0 0
        %1078 = vmatpush1.bf16.xpose.msra.mxu0 0
        %1079 = vmatprep.subr.bf16.mxu0 0
        %1080 = vmatpush1.bf16.xpose.msra.mxu0 0
        %1081 = vmatprep.mubr.bf16.mxu0 0
        %1082 = vmatmul.mubr.bf16.gmra.mrb[0].mxu0 %v1044
        %v1083 = vpop.f32.mrb[0].mxu0
        %v1084 = vadd.f32 0.0, %v1083
        %v1085 = vpop.f32.mrb[0].mxu0
        %v1086 = vpop.f32.mrb[0].mxu0
        %v1087 = vpop.f32.mrb[0].mxu0
        %1088 = vdwg.mxu0
        %v1089 = vsel %vm770, %v1034, -inf
        %1090 = vmax.xlane.f32.xlu0 %v1089
        %v1091 = vpop.xlane.xlu0 %1090
        %v1092 = vsel %vm770, %v1084, -inf
        %1093 = vmax.xlane.f32.xlu0 %v1092
        %v1094 = vpop.xlane.xlu0 %1093
        %v1095 = vsub.f32 %v1034, %v1091
        %v1096 = vsub.f32 %v1084, %v1094
        %v1097 = vmul.f32 %v1095, 1.442695
        %v1098 = vpow.pop %v1097
        %v1099 = vmul.f32 %v1096, 1.442695
        %v1100 = vpow.pop %v1099
        %v1101 = vsel %vm770, %v1098, 0.0
        %1102 = vadd.xlane.f32.xlu0 %v1101
        %v1103 = vpop.xlane.xlu0 %1102
        %v1104 = vsel %vm770, %v1100, 0.0
        %1105 = vadd.xlane.f32.xlu0 %v1104
        %v1106 = vpop.xlane.xlu0 %1105
        %v1107 = vrcp.pop %v1103
        %v1108 = vrcp.pop %v1106
        %v1109 = vmul.f32 %v1098, %v1107
        %v1110 = vmul.f32 %v1100, %v1108
        %v1111 = vpack.c.bf16 %v1109, %v1109
        %v1112 = vpack.c.bf16 %v1110, %v1110
        %1113 = vrot.lane.b32.xlu0 %v765, 56
        %v1114 = vpop.permute.xlu0 %1113
        %v1116 = vsel %vm770, %v1111, 0
        %v1119 = vsel %vm895, %v1114, 0
        %1121 = vmatprep.subr.bf16.mxu0 0
        %1122 = vmatpush1.bf16.msra.mxu0 %v1119
        %1123 = vmatprep.subr.bf16.mxu0 0
        %1124 = vmatpush1.bf16.msra.mxu0 0
        %1125 = vmatprep.subr.bf16.mxu0 0
        %1126 = vmatpush1.bf16.msra.mxu0 0
        %1127 = vmatprep.subr.bf16.mxu0 0
        %1128 = vmatpush1.bf16.msra.mxu0 0
        %1129 = vmatprep.subr.bf16.mxu0 0
        %1130 = vmatpush1.bf16.msra.mxu0 0
        %1131 = vmatprep.subr.bf16.mxu0 0
        %1132 = vmatpush1.bf16.msra.mxu0 0
        %1133 = vmatprep.subr.bf16.mxu0 0
        %1134 = vmatpush1.bf16.msra.mxu0 0
        %1135 = vmatprep.subr.bf16.mxu0 0
        %1136 = vmatpush1.bf16.msra.mxu0 0
        %1137 = vmatprep.subr.bf16.mxu0 0
        %1138 = vmatpush1.bf16.msra.mxu0 0
        %1139 = vmatprep.subr.bf16.mxu0 0
        %1140 = vmatpush1.bf16.msra.mxu0 0
        %1141 = vmatprep.subr.bf16.mxu0 0
        %1142 = vmatpush1.bf16.msra.mxu0 0
        %1143 = vmatprep.subr.bf16.mxu0 0
        %1144 = vmatpush1.bf16.msra.mxu0 0
        %1145 = vmatprep.subr.bf16.mxu0 0
        %1146 = vmatpush1.bf16.msra.mxu0 0
        %1147 = vmatprep.subr.bf16.mxu0 0
        %1148 = vmatpush1.bf16.msra.mxu0 0
        %1149 = vmatprep.subr.bf16.mxu0 0
        %1150 = vmatpush1.bf16.msra.mxu0 0
        %1151 = vmatprep.subr.bf16.mxu0 0
        %1152 = vmatpush1.bf16.msra.mxu0 0
        %1153 = vmatprep.mubr.bf16.mxu0 0
        %1154 = vmatmul.mubr.bf16.gmra.mrb[0].mxu0 %v1116
        %v1155 = vpop.f32.mrb[0].mxu0
        %v1156 = vadd.f32 0.0, %v1155
        %v1157 = vpop.f32.mrb[0].mxu0
        %v1158 = vpop.f32.mrb[0].mxu0
        %v1159 = vpop.f32.mrb[0].mxu0
        %1160 = vdwg.mxu0
        %1161 = vrot.lane.b32.xlu0 %v766, 56
        %v1162 = vpop.permute.xlu0 %1161
        %v1164 = vsel %vm770, %v1112, 0
        %v1167 = vsel %vm895, %v1162, 0
        %1169 = vmatprep.subr.bf16.mxu0 0
        %1170 = vmatpush1.bf16.msra.mxu0 %v1167
        %1171 = vmatprep.subr.bf16.mxu0 0
        %1172 = vmatpush1.bf16.msra.mxu0 0
        %1173 = vmatprep.subr.bf16.mxu0 0
        %1174 = vmatpush1.bf16.msra.mxu0 0
        %1175 = vmatprep.subr.bf16.mxu0 0
        %1176 = vmatpush1.bf16.msra.mxu0 0
        %1177 = vmatprep.subr.bf16.mxu0 0
        %1178 = vmatpush1.bf16.msra.mxu0 0
        %1179 = vmatprep.subr.bf16.mxu0 0
        %1180 = vmatpush1.bf16.msra.mxu0 0
        %1181 = vmatprep.subr.bf16.mxu0 0
        %1182 = vmatpush1.bf16.msra.mxu0 0
        %1183 = vmatprep.subr.bf16.mxu0 0
        %1184 = vmatpush1.bf16.msra.mxu0 0
        %1185 = vmatprep.subr.bf16.mxu0 0
        %1186 = vmatpush1.bf16.msra.mxu0 0
        %1187 = vmatprep.subr.bf16.mxu0 0
        %1188 = vmatpush1.bf16.msra.mxu0 0
        %1189 = vmatprep.subr.bf16.mxu0 0
        %1190 = vmatpush1.bf16.msra.mxu0 0
        %1191 = vmatprep.subr.bf16.mxu0 0
        %1192 = vmatpush1.bf16.msra.mxu0 0
        %1193 = vmatprep.subr.bf16.mxu0 0
        %1194 = vmatpush1.bf16.msra.mxu0 0
        %1195 = vmatprep.subr.bf16.mxu0 0
        %1196 = vmatpush1.bf16.msra.mxu0 0
        %1197 = vmatprep.subr.bf16.mxu0 0
        %1198 = vmatpush1.bf16.msra.mxu0 0
        %1199 = vmatprep.subr.bf16.mxu0 0
        %1200 = vmatpush1.bf16.msra.mxu0 0
        %1201 = vmatprep.mubr.bf16.mxu0 0
        %1202 = vmatmul.mubr.bf16.gmra.mrb[0].mxu0 %v1164
        %v1203 = vpop.f32.mrb[0].mxu0
        %v1204 = vadd.f32 0.0, %v1203
        %v1205 = vpop.f32.mrb[0].mxu0
        %v1206 = vpop.f32.mrb[0].mxu0
        %v1207 = vpop.f32.mrb[0].mxu0
        %1208 = vdwg.mxu0
        %1211 = vrot.lane.b32.xlu0 %v1156, 8
        %v1212 = vpop.permute.xlu0 %1211
        %1213 = vrot.lane.b32.xlu0 %v1204, 8
        %v1214 = vpop.permute.xlu0 %1213
        %vm1217 = vcmask 130112
        %1218 = vst.msk [vmem:[#allocation2] sm:$0xff] %vm1217, %v1212
        %1219 = vst.msk [vmem:[#allocation2 + $0x8] sm:$0xff] %vm1217, %v1214
        %1220 = vrot.lane.b32.xlu0 %v765, 112
        %v1221 = vpop.permute.xlu0 %1220
        %1222 = vrot.lane.b32.xlu0 %v765, 80
        %v1223 = vpop.permute.xlu0 %1222
        %v1225 = vsel %vm770, %v1221, 0
        %v1228 = vsel %vm770, %v1223, 0
        %1230 = vmatprep.subr.bf16.mxu0 0
        %1231 = vmatpush1.bf16.xpose.msra.mxu0 %v1228
        %1232 = vmatprep.subr.bf16.mxu0 0
        %1233 = vmatpush1.bf16.xpose.msra.mxu0 0
        %1234 = vmatprep.subr.bf16.mxu0 0
        %1235 = vmatpush1.bf16.xpose.msra.mxu0 0
        %1236 = vmatprep.subr.bf16.mxu0 0
        %1237 = vmatpush1.bf16.xpose.msra.mxu0 0
        %1238 = vmatprep.subr.bf16.mxu0 0
        %1239 = vmatpush1.bf16.xpose.msra.mxu0 0
        %1240 = vmatprep.subr.bf16.mxu0 0
        %1241 = vmatpush1.bf16.xpose.msra.mxu0 0
        %1242 = vmatprep.subr.bf16.mxu0 0
        %1243 = vmatpush1.bf16.xpose.msra.mxu0 0
        %1244 = vmatprep.subr.bf16.mxu0 0
        %1245 = vmatpush1.bf16.xpose.msra.mxu0 0
        %1246 = vmatprep.subr.bf16.mxu0 0
        %1247 = vmatpush1.bf16.xpose.msra.mxu0 0
        %1248 = vmatprep.subr.bf16.mxu0 0
        %1249 = vmatpush1.bf16.xpose.msra.mxu0 0
        %1250 = vmatprep.subr.bf16.mxu0 0
        %1251 = vmatpush1.bf16.xpose.msra.mxu0 0
        %1252 = vmatprep.subr.bf16.mxu0 0
        %1253 = vmatpush1.bf16.xpose.msra.mxu0 0
        %1254 = vmatprep.subr.bf16.mxu0 0
        %1255 = vmatpush1.bf16.xpose.msra.mxu0 0
        %1256 = vmatprep.subr.bf16.mxu0 0
        %1257 = vmatpush1.bf16.xpose.msra.mxu0 0
        %1258 = vmatprep.subr.bf16.mxu0 0
        %1259 = vmatpush1.bf16.xpose.msra.mxu0 0
        %1260 = vmatprep.subr.bf16.mxu0 0
        %1261 = vmatpush1.bf16.xpose.msra.mxu0 0
        %1262 = vmatprep.mubr.bf16.mxu0 0
        %1263 = vmatmul.mubr.bf16.gmra.mrb[0].mxu0 %v1225
        %v1264 = vpop.f32.mrb[0].mxu0
        %v1265 = vadd.f32 0.0, %v1264
        %v1266 = vpop.f32.mrb[0].mxu0
        %v1267 = vpop.f32.mrb[0].mxu0
        %v1268 = vpop.f32.mrb[0].mxu0
        %1269 = vdwg.mxu0
        %1270 = vrot.lane.b32.xlu0 %v766, 112
        %v1271 = vpop.permute.xlu0 %1270
        %1272 = vrot.lane.b32.xlu0 %v766, 80
        %v1273 = vpop.permute.xlu0 %1272
        %v1275 = vsel %vm770, %v1271, 0
        %v1278 = vsel %vm770, %v1273, 0
        %1280 = vmatprep.subr.bf16.mxu0 0
        %1281 = vmatpush1.bf16.xpose.msra.mxu0 %v1278
        %1282 = vmatprep.subr.bf16.mxu0 0
        %1283 = vmatpush1.bf16.xpose.msra.mxu0 0
        %1284 = vmatprep.subr.bf16.mxu0 0
        %1285 = vmatpush1.bf16.xpose.msra.mxu0 0
        %1286 = vmatprep.subr.bf16.mxu0 0
        %1287 = vmatpush1.bf16.xpose.msra.mxu0 0
        %1288 = vmatprep.subr.bf16.mxu0 0
        %1289 = vmatpush1.bf16.xpose.msra.mxu0 0
        %1290 = vmatprep.subr.bf16.mxu0 0
        %1291 = vmatpush1.bf16.xpose.msra.mxu0 0
        %1292 = vmatprep.subr.bf16.mxu0 0
        %1293 = vmatpush1.bf16.xpose.msra.mxu0 0
        %1294 = vmatprep.subr.bf16.mxu0 0
        %1295 = vmatpush1.bf16.xpose.msra.mxu0 0
        %1296 = vmatprep.subr.bf16.mxu0 0
        %1297 = vmatpush1.bf16.xpose.msra.mxu0 0
        %1298 = vmatprep.subr.bf16.mxu0 0
        %1299 = vmatpush1.bf16.xpose.msra.mxu0 0
        %1300 = vmatprep.subr.bf16.mxu0 0
        %1301 = vmatpush1.bf16.xpose.msra.mxu0 0
        %1302 = vmatprep.subr.bf16.mxu0 0
        %1303 = vmatpush1.bf16.xpose.msra.mxu0 0
        %1304 = vmatprep.subr.bf16.mxu0 0
        %1305 = vmatpush1.bf16.xpose.msra.mxu0 0
        %1306 = vmatprep.subr.bf16.mxu0 0
        %1307 = vmatpush1.bf16.xpose.msra.mxu0 0
        %1308 = vmatprep.subr.bf16.mxu0 0
        %1309 = vmatpush1.bf16.xpose.msra.mxu0 0
        %1310 = vmatprep.subr.bf16.mxu0 0
        %1311 = vmatpush1.bf16.xpose.msra.mxu0 0
        %1312 = vmatprep.mubr.bf16.mxu0 0
        %1313 = vmatmul.mubr.bf16.gmra.mrb[0].mxu0 %v1275
        %v1314 = vpop.f32.mrb[0].mxu0
        %v1315 = vadd.f32 0.0, %v1314
        %v1316 = vpop.f32.mrb[0].mxu0
        %v1317 = vpop.f32.mrb[0].mxu0
        %v1318 = vpop.f32.mrb[0].mxu0
        %1319 = vdwg.mxu0
        %v1320 = vsel %vm770, %v1265, -inf
        %1321 = vmax.xlane.f32.xlu0 %v1320
        %v1322 = vpop.xlane.xlu0 %1321
        %v1323 = vsel %vm770, %v1315, -inf
        %1324 = vmax.xlane.f32.xlu0 %v1323
        %v1325 = vpop.xlane.xlu0 %1324
        %v1326 = vsub.f32 %v1265, %v1322
        %v1327 = vsub.f32 %v1315, %v1325
        %v1328 = vmul.f32 %v1326, 1.442695
        %v1329 = vpow.pop %v1328
        %v1330 = vmul.f32 %v1327, 1.442695
        %v1331 = vpow.pop %v1330
        %v1332 = vsel %vm770, %v1329, 0.0
        %1333 = vadd.xlane.f32.xlu0 %v1332
        %v1334 = vpop.xlane.xlu0 %1333
        %v1335 = vsel %vm770, %v1331, 0.0
        %1336 = vadd.xlane.f32.xlu0 %v1335
        %v1337 = vpop.xlane.xlu0 %1336
        %v1338 = vrcp.pop %v1334
        %v1339 = vrcp.pop %v1337
        %v1340 = vmul.f32 %v1329, %v1338
        %v1341 = vmul.f32 %v1331, %v1339
        %v1342 = vpack.c.bf16 %v1340, %v1340
        %v1343 = vpack.c.bf16 %v1341, %v1341
        %1344 = vrot.lane.b32.xlu0 %v765, 48
        %v1345 = vpop.permute.xlu0 %1344
        %v1347 = vsel %vm770, %v1342, 0
        %v1350 = vsel %vm895, %v1345, 0
        %1352 = vmatprep.subr.bf16.mxu0 0
        %1353 = vmatpush1.bf16.msra.mxu0 %v1350
        %1354 = vmatprep.subr.bf16.mxu0 0
        %1355 = vmatpush1.bf16.msra.mxu0 0
        %1356 = vmatprep.subr.bf16.mxu0 0
        %1357 = vmatpush1.bf16.msra.mxu0 0
        %1358 = vmatprep.subr.bf16.mxu0 0
        %1359 = vmatpush1.bf16.msra.mxu0 0
        %1360 = vmatprep.subr.bf16.mxu0 0
        %1361 = vmatpush1.bf16.msra.mxu0 0
        %1362 = vmatprep.subr.bf16.mxu0 0
        %1363 = vmatpush1.bf16.msra.mxu0 0
        %1364 = vmatprep.subr.bf16.mxu0 0
        %1365 = vmatpush1.bf16.msra.mxu0 0
        %1366 = vmatprep.subr.bf16.mxu0 0
        %1367 = vmatpush1.bf16.msra.mxu0 0
        %1368 = vmatprep.subr.bf16.mxu0 0
        %1369 = vmatpush1.bf16.msra.mxu0 0
        %1370 = vmatprep.subr.bf16.mxu0 0
        %1371 = vmatpush1.bf16.msra.mxu0 0
        %1372 = vmatprep.subr.bf16.mxu0 0
        %1373 = vmatpush1.bf16.msra.mxu0 0
        %1374 = vmatprep.subr.bf16.mxu0 0
        %1375 = vmatpush1.bf16.msra.mxu0 0
        %1376 = vmatprep.subr.bf16.mxu0 0
        %1377 = vmatpush1.bf16.msra.mxu0 0
        %1378 = vmatprep.subr.bf16.mxu0 0
        %1379 = vmatpush1.bf16.msra.mxu0 0
        %1380 = vmatprep.subr.bf16.mxu0 0
        %1381 = vmatpush1.bf16.msra.mxu0 0
        %1382 = vmatprep.subr.bf16.mxu0 0
        %1383 = vmatpush1.bf16.msra.mxu0 0
        %1384 = vmatprep.mubr.bf16.mxu0 0
        %1385 = vmatmul.mubr.bf16.gmra.mrb[0].mxu0 %v1347
        %v1386 = vpop.f32.mrb[0].mxu0
        %v1387 = vadd.f32 0.0, %v1386
        %v1388 = vpop.f32.mrb[0].mxu0
        %v1389 = vpop.f32.mrb[0].mxu0
        %v1390 = vpop.f32.mrb[0].mxu0
        %1391 = vdwg.mxu0
        %1392 = vrot.lane.b32.xlu0 %v766, 48
        %v1393 = vpop.permute.xlu0 %1392
        %v1395 = vsel %vm770, %v1343, 0
        %v1398 = vsel %vm895, %v1393, 0
        %1400 = vmatprep.subr.bf16.mxu0 0
        %1401 = vmatpush1.bf16.msra.mxu0 %v1398
        %1402 = vmatprep.subr.bf16.mxu0 0
        %1403 = vmatpush1.bf16.msra.mxu0 0
        %1404 = vmatprep.subr.bf16.mxu0 0
        %1405 = vmatpush1.bf16.msra.mxu0 0
        %1406 = vmatprep.subr.bf16.mxu0 0
        %1407 = vmatpush1.bf16.msra.mxu0 0
        %1408 = vmatprep.subr.bf16.mxu0 0
        %1409 = vmatpush1.bf16.msra.mxu0 0
        %1410 = vmatprep.subr.bf16.mxu0 0
        %1411 = vmatpush1.bf16.msra.mxu0 0
        %1412 = vmatprep.subr.bf16.mxu0 0
        %1413 = vmatpush1.bf16.msra.mxu0 0
        %1414 = vmatprep.subr.bf16.mxu0 0
        %1415 = vmatpush1.bf16.msra.mxu0 0
        %1416 = vmatprep.subr.bf16.mxu0 0
        %1417 = vmatpush1.bf16.msra.mxu0 0
        %1418 = vmatprep.subr.bf16.mxu0 0
        %1419 = vmatpush1.bf16.msra.mxu0 0
        %1420 = vmatprep.subr.bf16.mxu0 0
        %1421 = vmatpush1.bf16.msra.mxu0 0
        %1422 = vmatprep.subr.bf16.mxu0 0
        %1423 = vmatpush1.bf16.msra.mxu0 0
        %1424 = vmatprep.subr.bf16.mxu0 0
        %1425 = vmatpush1.bf16.msra.mxu0 0
        %1426 = vmatprep.subr.bf16.mxu0 0
        %1427 = vmatpush1.bf16.msra.mxu0 0
        %1428 = vmatprep.subr.bf16.mxu0 0
        %1429 = vmatpush1.bf16.msra.mxu0 0
        %1430 = vmatprep.subr.bf16.mxu0 0
        %1431 = vmatpush1.bf16.msra.mxu0 0
        %1432 = vmatprep.mubr.bf16.mxu0 0
        %1433 = vmatmul.mubr.bf16.gmra.mrb[0].mxu0 %v1395
        %v1434 = vpop.f32.mrb[0].mxu0
        %v1435 = vadd.f32 0.0, %v1434
        %v1436 = vpop.f32.mrb[0].mxu0
        %v1437 = vpop.f32.mrb[0].mxu0
        %v1438 = vpop.f32.mrb[0].mxu0
        %1439 = vdwg.mxu0
        %1442 = vrot.lane.b32.xlu0 %v1387, 16
        %v1443 = vpop.permute.xlu0 %1442
        %1444 = vrot.lane.b32.xlu0 %v1435, 16
        %v1445 = vpop.permute.xlu0 %1444
        %vm1448 = vcmask 195712
        %1449 = vst.msk [vmem:[#allocation2] sm:$0xff] %vm1448, %v1443
        %1450 = vst.msk [vmem:[#allocation2 + $0x8] sm:$0xff] %vm1448, %v1445
        %1451 = vrot.lane.b32.xlu0 %v765, 104
        %v1452 = vpop.permute.xlu0 %1451
        %1453 = vrot.lane.b32.xlu0 %v765, 72
        %v1454 = vpop.permute.xlu0 %1453
        %v1456 = vsel %vm770, %v1452, 0
        %v1459 = vsel %vm770, %v1454, 0
        %1461 = vmatprep.subr.bf16.mxu0 0
        %1462 = vmatpush1.bf16.xpose.msra.mxu0 %v1459
        %1463 = vmatprep.subr.bf16.mxu0 0
        %1464 = vmatpush1.bf16.xpose.msra.mxu0 0
        %1465 = vmatprep.subr.bf16.mxu0 0
        %1466 = vmatpush1.bf16.xpose.msra.mxu0 0
        %1467 = vmatprep.subr.bf16.mxu0 0
        %1468 = vmatpush1.bf16.xpose.msra.mxu0 0
        %1469 = vmatprep.subr.bf16.mxu0 0
        %1470 = vmatpush1.bf16.xpose.msra.mxu0 0
        %1471 = vmatprep.subr.bf16.mxu0 0
        %1472 = vmatpush1.bf16.xpose.msra.mxu0 0
        %1473 = vmatprep.subr.bf16.mxu0 0
        %1474 = vmatpush1.bf16.xpose.msra.mxu0 0
        %1475 = vmatprep.subr.bf16.mxu0 0
        %1476 = vmatpush1.bf16.xpose.msra.mxu0 0
        %1477 = vmatprep.subr.bf16.mxu0 0
        %1478 = vmatpush1.bf16.xpose.msra.mxu0 0
        %1479 = vmatprep.subr.bf16.mxu0 0
        %1480 = vmatpush1.bf16.xpose.msra.mxu0 0
        %1481 = vmatprep.subr.bf16.mxu0 0
        %1482 = vmatpush1.bf16.xpose.msra.mxu0 0
        %1483 = vmatprep.subr.bf16.mxu0 0
        %1484 = vmatpush1.bf16.xpose.msra.mxu0 0
        %1485 = vmatprep.subr.bf16.mxu0 0
        %1486 = vmatpush1.bf16.xpose.msra.mxu0 0
        %1487 = vmatprep.subr.bf16.mxu0 0
        %1488 = vmatpush1.bf16.xpose.msra.mxu0 0
        %1489 = vmatprep.subr.bf16.mxu0 0
        %1490 = vmatpush1.bf16.xpose.msra.mxu0 0
        %1491 = vmatprep.subr.bf16.mxu0 0
        %1492 = vmatpush1.bf16.xpose.msra.mxu0 0
        %1493 = vmatprep.mubr.bf16.mxu0 0
        %1494 = vmatmul.mubr.bf16.gmra.mrb[0].mxu0 %v1456
        %v1495 = vpop.f32.mrb[0].mxu0
        %v1496 = vadd.f32 0.0, %v1495
        %v1497 = vpop.f32.mrb[0].mxu0
        %v1498 = vpop.f32.mrb[0].mxu0
        %v1499 = vpop.f32.mrb[0].mxu0
        %1500 = vdwg.mxu0
        %1501 = vrot.lane.b32.xlu0 %v766, 104
        %v1502 = vpop.permute.xlu0 %1501
        %1503 = vrot.lane.b32.xlu0 %v766, 72
        %v1504 = vpop.permute.xlu0 %1503
        %v1506 = vsel %vm770, %v1502, 0
        %v1509 = vsel %vm770, %v1504, 0
        %1511 = vmatprep.subr.bf16.mxu0 0
        %1512 = vmatpush1.bf16.xpose.msra.mxu0 %v1509
        %1513 = vmatprep.subr.bf16.mxu0 0
        %1514 = vmatpush1.bf16.xpose.msra.mxu0 0
        %1515 = vmatprep.subr.bf16.mxu0 0
        %1516 = vmatpush1.bf16.xpose.msra.mxu0 0
        %1517 = vmatprep.subr.bf16.mxu0 0
        %1518 = vmatpush1.bf16.xpose.msra.mxu0 0
        %1519 = vmatprep.subr.bf16.mxu0 0
        %1520 = vmatpush1.bf16.xpose.msra.mxu0 0
        %1521 = vmatprep.subr.bf16.mxu0 0
        %1522 = vmatpush1.bf16.xpose.msra.mxu0 0
        %1523 = vmatprep.subr.bf16.mxu0 0
        %1524 = vmatpush1.bf16.xpose.msra.mxu0 0
        %1525 = vmatprep.subr.bf16.mxu0 0
        %1526 = vmatpush1.bf16.xpose.msra.mxu0 0
        %1527 = vmatprep.subr.bf16.mxu0 0
        %1528 = vmatpush1.bf16.xpose.msra.mxu0 0
        %1529 = vmatprep.subr.bf16.mxu0 0
        %1530 = vmatpush1.bf16.xpose.msra.mxu0 0
        %1531 = vmatprep.subr.bf16.mxu0 0
        %1532 = vmatpush1.bf16.xpose.msra.mxu0 0
        %1533 = vmatprep.subr.bf16.mxu0 0
        %1534 = vmatpush1.bf16.xpose.msra.mxu0 0
        %1535 = vmatprep.subr.bf16.mxu0 0
        %1536 = vmatpush1.bf16.xpose.msra.mxu0 0
        %1537 = vmatprep.subr.bf16.mxu0 0
        %1538 = vmatpush1.bf16.xpose.msra.mxu0 0
        %1539 = vmatprep.subr.bf16.mxu0 0
        %1540 = vmatpush1.bf16.xpose.msra.mxu0 0
        %1541 = vmatprep.subr.bf16.mxu0 0
        %1542 = vmatpush1.bf16.xpose.msra.mxu0 0
        %1543 = vmatprep.mubr.bf16.mxu0 0
        %1544 = vmatmul.mubr.bf16.gmra.mrb[0].mxu0 %v1506
        %v1545 = vpop.f32.mrb[0].mxu0
        %v1546 = vadd.f32 0.0, %v1545
        %v1547 = vpop.f32.mrb[0].mxu0
        %v1548 = vpop.f32.mrb[0].mxu0
        %v1549 = vpop.f32.mrb[0].mxu0
        %1550 = vdwg.mxu0
        %v1551 = vsel %vm770, %v1496, -inf
        %1552 = vmax.xlane.f32.xlu0 %v1551
        %v1553 = vpop.xlane.xlu0 %1552
        %v1554 = vsel %vm770, %v1546, -inf
        %1555 = vmax.xlane.f32.xlu0 %v1554
        %v1556 = vpop.xlane.xlu0 %1555
        %v1557 = vsub.f32 %v1496, %v1553
        %v1558 = vsub.f32 %v1546, %v1556
        %v1559 = vmul.f32 %v1557, 1.442695
        %v1560 = vpow.pop %v1559
        %v1561 = vmul.f32 %v1558, 1.442695
        %v1562 = vpow.pop %v1561
        %v1563 = vsel %vm770, %v1560, 0.0
        %1564 = vadd.xlane.f32.xlu0 %v1563
        %v1565 = vpop.xlane.xlu0 %1564
        %v1566 = vsel %vm770, %v1562, 0.0
        %1567 = vadd.xlane.f32.xlu0 %v1566
        %v1568 = vpop.xlane.xlu0 %1567
        %v1569 = vrcp.pop %v1565
        %v1570 = vrcp.pop %v1568
        %v1571 = vmul.f32 %v1560, %v1569
        %v1572 = vmul.f32 %v1562, %v1570
        %v1573 = vpack.c.bf16 %v1571, %v1571
        %v1574 = vpack.c.bf16 %v1572, %v1572
        %1575 = vrot.lane.b32.xlu0 %v765, 40
        %v1576 = vpop.permute.xlu0 %1575
        %v1578 = vsel %vm770, %v1573, 0
        %v1581 = vsel %vm895, %v1576, 0
        %1583 = vmatprep.subr.bf16.mxu0 0
        %1584 = vmatpush1.bf16.msra.mxu0 %v1581
        %1585 = vmatprep.subr.bf16.mxu0 0
        %1586 = vmatpush1.bf16.msra.mxu0 0
        %1587 = vmatprep.subr.bf16.mxu0 0
        %1588 = vmatpush1.bf16.msra.mxu0 0
        %1589 = vmatprep.subr.bf16.mxu0 0
        %1590 = vmatpush1.bf16.msra.mxu0 0
        %1591 = vmatprep.subr.bf16.mxu0 0
        %1592 = vmatpush1.bf16.msra.mxu0 0
        %1593 = vmatprep.subr.bf16.mxu0 0
        %1594 = vmatpush1.bf16.msra.mxu0 0
        %1595 = vmatprep.subr.bf16.mxu0 0
        %1596 = vmatpush1.bf16.msra.mxu0 0
        %1597 = vmatprep.subr.bf16.mxu0 0
        %1598 = vmatpush1.bf16.msra.mxu0 0
        %1599 = vmatprep.subr.bf16.mxu0 0
        %1600 = vmatpush1.bf16.msra.mxu0 0
        %1601 = vmatprep.subr.bf16.mxu0 0
        %1602 = vmatpush1.bf16.msra.mxu0 0
        %1603 = vmatprep.subr.bf16.mxu0 0
        %1604 = vmatpush1.bf16.msra.mxu0 0
        %1605 = vmatprep.subr.bf16.mxu0 0
        %1606 = vmatpush1.bf16.msra.mxu0 0
        %1607 = vmatprep.subr.bf16.mxu0 0
        %1608 = vmatpush1.bf16.msra.mxu0 0
        %1609 = vmatprep.subr.bf16.mxu0 0
        %1610 = vmatpush1.bf16.msra.mxu0 0
        %1611 = vmatprep.subr.bf16.mxu0 0
        %1612 = vmatpush1.bf16.msra.mxu0 0
        %1613 = vmatprep.subr.bf16.mxu0 0
        %1614 = vmatpush1.bf16.msra.mxu0 0
        %1615 = vmatprep.mubr.bf16.mxu0 0
        %1616 = vmatmul.mubr.bf16.gmra.mrb[0].mxu0 %v1578
        %v1617 = vpop.f32.mrb[0].mxu0
        %v1618 = vadd.f32 0.0, %v1617
        %v1619 = vpop.f32.mrb[0].mxu0
        %v1620 = vpop.f32.mrb[0].mxu0
        %v1621 = vpop.f32.mrb[0].mxu0
        %1622 = vdwg.mxu0
        %1623 = vrot.lane.b32.xlu0 %v766, 40
        %v1624 = vpop.permute.xlu0 %1623
        %v1626 = vsel %vm770, %v1574, 0
        %v1629 = vsel %vm895, %v1624, 0
        %1631 = vmatprep.subr.bf16.mxu0 0
        %1632 = vmatpush1.bf16.msra.mxu0 %v1629
        %1633 = vmatprep.subr.bf16.mxu0 0
        %1634 = vmatpush1.bf16.msra.mxu0 0
        %1635 = vmatprep.subr.bf16.mxu0 0
        %1636 = vmatpush1.bf16.msra.mxu0 0
        %1637 = vmatprep.subr.bf16.mxu0 0
        %1638 = vmatpush1.bf16.msra.mxu0 0
        %1639 = vmatprep.subr.bf16.mxu0 0
        %1640 = vmatpush1.bf16.msra.mxu0 0
        %1641 = vmatprep.subr.bf16.mxu0 0
        %1642 = vmatpush1.bf16.msra.mxu0 0
        %1643 = vmatprep.subr.bf16.mxu0 0
        %1644 = vmatpush1.bf16.msra.mxu0 0
        %1645 = vmatprep.subr.bf16.mxu0 0
        %1646 = vmatpush1.bf16.msra.mxu0 0
        %1647 = vmatprep.subr.bf16.mxu0 0
        %1648 = vmatpush1.bf16.msra.mxu0 0
        %1649 = vmatprep.subr.bf16.mxu0 0
        %1650 = vmatpush1.bf16.msra.mxu0 0
        %1651 = vmatprep.subr.bf16.mxu0 0
        %1652 = vmatpush1.bf16.msra.mxu0 0
        %1653 = vmatprep.subr.bf16.mxu0 0
        %1654 = vmatpush1.bf16.msra.mxu0 0
        %1655 = vmatprep.subr.bf16.mxu0 0
        %1656 = vmatpush1.bf16.msra.mxu0 0
        %1657 = vmatprep.subr.bf16.mxu0 0
        %1658 = vmatpush1.bf16.msra.mxu0 0
        %1659 = vmatprep.subr.bf16.mxu0 0
        %1660 = vmatpush1.bf16.msra.mxu0 0
        %1661 = vmatprep.subr.bf16.mxu0 0
        %1662 = vmatpush1.bf16.msra.mxu0 0
        %1663 = vmatprep.mubr.bf16.mxu0 0
        %1664 = vmatmul.mubr.bf16.gmra.mrb[0].mxu0 %v1626
        %v1665 = vpop.f32.mrb[0].mxu0
        %v1666 = vadd.f32 0.0, %v1665
        %v1667 = vpop.f32.mrb[0].mxu0
        %v1668 = vpop.f32.mrb[0].mxu0
        %v1669 = vpop.f32.mrb[0].mxu0
        %1670 = vdwg.mxu0
        %1673 = vrot.lane.b32.xlu0 %v1618, 24
        %v1674 = vpop.permute.xlu0 %1673
        %1675 = vrot.lane.b32.xlu0 %v1666, 24
        %v1676 = vpop.permute.xlu0 %1675
        %vm1679 = vcmask 261312
        %1680 = vst.msk [vmem:[#allocation2] sm:$0xff] %vm1679, %v1674
        %1681 = vst.msk [vmem:[#allocation2 + $0x8] sm:$0xff] %vm1679, %v1676
        %v1682 = vld [vmem:[#allocation2] sm:$0xff]
        %v1683 = vld [vmem:[#allocation2 + $0x8] sm:$0xff]
        %v1684 = vpack.c.bf16 %v1683, %v1682
        %v1685 = vld [vmem:[%s612] sm:$0xf]
        %v1686 = vld [vmem:[%s612 + $0x4] sm:$0xf]
        %v1687 = vld [vmem:[%s612 + $0x8] sm:$0xf]
        %v1688 = vld [vmem:[%s612 + $0xc] sm:$0xf]
        %v1689 = vld [vmem:[%s615] sm:$0x1]
        %v1691 = vlaneseq
        %v1692 = vshrl.u32 %v1691, 7
        %v1693 = vsub.s32 0, %v1692
        %v1694 = vrot.slane %v1689, %v1693
        %v1700 = vunpack.c.l.b16 %v1685
        %v1701 = vunpack.c.l.b16 %v1686
        %v1702 = vunpack.c.l.b16 %v1687
        %v1703 = vunpack.c.l.b16 %v1688
        %v1704 = vpack.c.b16 %v1701, %v1700
        %v1705 = vpack.c.b16 %v1703, %v1702
        %v1709 = vsel %vm651, %v1684, 0
        %1711 = vmatprep.subr.bf16.mxu0 0
        %1712 = vmatpush1.bf16.msra.mxu0 %v1704
        %1713 = vmatprep.subr.bf16.mxu0 0
        %1714 = vmatpush1.bf16.msra.mxu0 %v1705
        %1715 = vmatprep.subr.bf16.mxu0 0
        %1716 = vmatpush1.bf16.msra.mxu0 0
        %1717 = vmatprep.subr.bf16.mxu0 0
        %1718 = vmatpush1.bf16.msra.mxu0 0
        %1719 = vmatprep.subr.bf16.mxu0 0
        %1720 = vmatpush1.bf16.msra.mxu0 0
        %1721 = vmatprep.subr.bf16.mxu0 0
        %1722 = vmatpush1.bf16.msra.mxu0 0
        %1723 = vmatprep.subr.bf16.mxu0 0
        %1724 = vmatpush1.bf16.msra.mxu0 0
        %1725 = vmatprep.subr.bf16.mxu0 0
        %1726 = vmatpush1.bf16.msra.mxu0 0
        %1727 = vmatprep.subr.bf16.mxu0 0
        %1728 = vmatpush1.bf16.msra.mxu0 0
        %1729 = vmatprep.subr.bf16.mxu0 0
        %1730 = vmatpush1.bf16.msra.mxu0 0
        %1731 = vmatprep.subr.bf16.mxu0 0
        %1732 = vmatpush1.bf16.msra.mxu0 0
        %1733 = vmatprep.subr.bf16.mxu0 0
        %1734 = vmatpush1.bf16.msra.mxu0 0
        %1735 = vmatprep.subr.bf16.mxu0 0
        %1736 = vmatpush1.bf16.msra.mxu0 0
        %1737 = vmatprep.subr.bf16.mxu0 0
        %1738 = vmatpush1.bf16.msra.mxu0 0
        %1739 = vmatprep.subr.bf16.mxu0 0
        %1740 = vmatpush1.bf16.msra.mxu0 0
        %1741 = vmatprep.subr.bf16.mxu0 0
        %1742 = vmatpush1.bf16.msra.mxu0 0
        %1743 = vmatprep.mubr.bf16.mxu0 0
        %1744 = vmatmul.mubr.bf16.gmra.mrb[0].mxu0 %v1709
        %v1745 = vpop.f32.mrb[0].mxu0
        %v1746 = vadd.f32 %v1694, %v1745
        %v1747 = vpop.f32.mrb[0].mxu0
        %v1748 = vpop.f32.mrb[0].mxu0
        %v1749 = vadd.f32 %v1694, %v1748
        %v1750 = vpop.f32.mrb[0].mxu0
        %1751 = vdwg.mxu0
        %v1752 = vadd.f32 %v649, %v1746
        %v1753 = vadd.f32 %v650, %v1749
        %v1754 = vsel %vm651, %v1752, 0.0
        %1755 = vadd.xlane.f32.xlu0 %v1754
        %v1756 = vpop.xlane.xlu0 %1755
        %v1757 = vsel %vm651, %v1753, 0.0
        %1758 = vadd.xlane.f32.xlu0 %v1757
        %v1759 = vpop.xlane.xlu0 %1758
        %v1760 = vmul.f32 %v1756, %v658
        %v1761 = vmul.f32 %v1759, %v658
        %v1762 = vsub.f32 %v1752, %v1760
        %v1763 = vsub.f32 %v1753, %v1761
        %v1764 = vmul.f32 %v1762, %v1762
        %v1765 = vmul.f32 %v1763, %v1763
        %v1766 = vsel %vm651, %v1764, 0.0
        %1767 = vadd.xlane.f32.xlu0 %v1766
        %v1768 = vpop.xlane.xlu0 %1767
        %v1769 = vsel %vm651, %v1765, 0.0
        %1770 = vadd.xlane.f32.xlu0 %v1769
        %v1771 = vpop.xlane.xlu0 %1770
        %v1772 = vmul.f32 %v1768, %v658
        %v1773 = vmul.f32 %v1771, %v658
        %v1774 = vadd.f32 %v1772, 1e-05
        %v1775 = vadd.f32 %v1773, 1e-05
        %v1776 = vrsqrt.pop %v1774
        %v1777 = vrsqrt.pop %v1775
        %v1778 = vmul.f32 %v1762, %v1776
        %v1779 = vmul.f32 %v1763, %v1777
        %v1780 = vld [vmem:[%s618] sm:$0x1]
        %v1782 = vlaneseq
        %v1783 = vshrl.u32 %v1782, 7
        %v1784 = vsub.s32 0, %v1783
        %v1785 = vrot.slane %v1780, %v1784
        %v1787 = vmul.f32 %v1778, %v1785
        %v1788 = vmul.f32 %v1779, %v1785
        %v1789 = vld [vmem:[%s621] sm:$0x1]
        %v1791 = vlaneseq
        %v1792 = vshrl.u32 %v1791, 7
        %v1793 = vsub.s32 0, %v1792
        %v1794 = vrot.slane %v1789, %v1793
        %v1796 = vadd.f32 %v1787, %v1794
        %v1797 = vadd.f32 %v1788, %v1794
        %v1798 = vpack.c.bf16 %v1797, %v1796
        %v1799 = vld [vmem:[%s626] sm:$0xf]
        %v1800 = vld [vmem:[%s626 + $0x4] sm:$0xf]
        %v1801 = vld [vmem:[%s626 + $0x8] sm:$0xf]
        %v1802 = vld [vmem:[%s626 + $0xc] sm:$0xf]
        %v1803 = vld [vmem:[%s629] sm:$0x1]
        %v1805 = vlaneseq
        %v1806 = vshrl.u32 %v1805, 7
        %v1807 = vsub.s32 0, %v1806
        %v1808 = vrot.slane %v1803, %v1807
        %v1814 = vunpack.c.l.b16 %v1799
        %v1815 = vunpack.c.l.b16 %v1800
        %v1816 = vunpack.c.l.b16 %v1801
        %v1817 = vunpack.c.l.b16 %v1802
        %v1818 = vpack.c.b16 %v1815, %v1814
        %v1819 = vpack.c.b16 %v1817, %v1816
        %v1823 = vsel %vm651, %v1798, 0
        %1825 = vmatprep.subr.bf16.mxu0 0
        %1826 = vmatpush1.bf16.msra.mxu0 %v1818
        %1827 = vmatprep.subr.bf16.mxu0 0
        %1828 = vmatpush1.bf16.msra.mxu0 %v1819
        %1829 = vmatprep.subr.bf16.mxu0 0
        %1830 = vmatpush1.bf16.msra.mxu0 0
        %1831 = vmatprep.subr.bf16.mxu0 0
        %1832 = vmatpush1.bf16.msra.mxu0 0
        %1833 = vmatprep.subr.bf16.mxu0 0
        %1834 = vmatpush1.bf16.msra.mxu0 0
        %1835 = vmatprep.subr.bf16.mxu0 0
        %1836 = vmatpush1.bf16.msra.mxu0 0
        %1837 = vmatprep.subr.bf16.mxu0 0
        %1838 = vmatpush1.bf16.msra.mxu0 0
        %1839 = vmatprep.subr.bf16.mxu0 0
        %1840 = vmatpush1.bf16.msra.mxu0 0
        %1841 = vmatprep.subr.bf16.mxu0 0
        %1842 = vmatpush1.bf16.msra.mxu0 0
        %1843 = vmatprep.subr.bf16.mxu0 0
        %1844 = vmatpush1.bf16.msra.mxu0 0
        %1845 = vmatprep.subr.bf16.mxu0 0
        %1846 = vmatpush1.bf16.msra.mxu0 0
        %1847 = vmatprep.subr.bf16.mxu0 0
        %1848 = vmatpush1.bf16.msra.mxu0 0
        %1849 = vmatprep.subr.bf16.mxu0 0
        %1850 = vmatpush1.bf16.msra.mxu0 0
        %1851 = vmatprep.subr.bf16.mxu0 0
        %1852 = vmatpush1.bf16.msra.mxu0 0
        %1853 = vmatprep.subr.bf16.mxu0 0
        %1854 = vmatpush1.bf16.msra.mxu0 0
        %1855 = vmatprep.subr.bf16.mxu0 0
        %1856 = vmatpush1.bf16.msra.mxu0 0
        %1857 = vmatprep.mubr.bf16.mxu0 0
        %1858 = vmatmul.mubr.bf16.gmra.mrb[0].mxu0 %v1823
        %v1859 = vpop.f32.mrb[0].mxu0
        %v1860 = vadd.f32 %v1808, %v1859
        %v1861 = vpop.f32.mrb[0].mxu0
        %v1862 = vpop.f32.mrb[0].mxu0
        %v1863 = vadd.f32 %v1808, %v1862
        %v1864 = vpop.f32.mrb[0].mxu0
        %1865 = vdwg.mxu0
        %v1866 = vmul.f32 %v1860, 1.702
        %v1867 = vmul.f32 %v1863, 1.702
        %v1868 = vxor.u32 %v1866, 2147483648
        %v1869 = vxor.u32 %v1867, 2147483648
        %v1870 = vmul.f32 %v1868, 1.442695
        %v1871 = vpow.pop %v1870
        %v1872 = vmul.f32 %v1869, 1.442695
        %v1873 = vpow.pop %v1872
        %v1874 = vadd.f32 %v1871, 1.0
        %v1875 = vadd.f32 %v1873, 1.0
        %v1876 = vrcp.pop %v1874
        %v1877 = vmul.f32 1.0, %v1876
        %v1878 = vrcp.pop %v1875
        %v1879 = vmul.f32 1.0, %v1878
        %v1880 = vmul.f32 %v1860, %v1877
        %v1881 = vmul.f32 %v1863, %v1879
        %v1882 = vpack.c.bf16 %v1881, %v1880
        %v1883 = vld [vmem:[%s634] sm:$0xf]
        %v1884 = vld [vmem:[%s634 + $0x4] sm:$0xf]
        %v1885 = vld [vmem:[%s634 + $0x8] sm:$0xf]
        %v1886 = vld [vmem:[%s634 + $0xc] sm:$0xf]
        %v1887 = vld [vmem:[%s634 + $0x10] sm:$0xf]
        %v1888 = vld [vmem:[%s634 + $0x14] sm:$0xf]
        %v1889 = vld [vmem:[%s634 + $0x18] sm:$0xf]
        %v1890 = vld [vmem:[%s634 + $0x1c] sm:$0xf]
        %v1891 = vld [vmem:[%s634 + $0x20] sm:$0xf]
        %v1892 = vld [vmem:[%s634 + $0x24] sm:$0xf]
        %v1893 = vld [vmem:[%s634 + $0x28] sm:$0xf]
        %v1894 = vld [vmem:[%s634 + $0x2c] sm:$0xf]
        %v1895 = vld [vmem:[%s634 + $0x30] sm:$0xf]
        %v1896 = vld [vmem:[%s634 + $0x34] sm:$0xf]
        %v1897 = vld [vmem:[%s634 + $0x38] sm:$0xf]
        %v1898 = vld [vmem:[%s634 + $0x3c] sm:$0xf]
        %v1899 = vld [vmem:[%s637] sm:$0x1]
        %v1901 = vlaneseq
        %v1902 = vshrl.u32 %v1901, 7
        %v1903 = vsub.s32 0, %v1902
        %v1904 = vrot.slane %v1899, %v1903
        %v1922 = vunpack.c.l.b16 %v1883
        %v1923 = vunpack.c.l.b16 %v1884
        %v1924 = vunpack.c.l.b16 %v1885
        %v1925 = vunpack.c.l.b16 %v1886
        %v1926 = vunpack.c.l.b16 %v1887
        %v1927 = vunpack.c.l.b16 %v1888
        %v1928 = vunpack.c.l.b16 %v1889
        %v1929 = vunpack.c.l.b16 %v1890
        %v1930 = vunpack.c.l.b16 %v1891
        %v1931 = vunpack.c.l.b16 %v1892
        %v1932 = vunpack.c.l.b16 %v1893
        %v1933 = vunpack.c.l.b16 %v1894
        %v1934 = vunpack.c.l.b16 %v1895
        %v1935 = vunpack.c.l.b16 %v1896
        %v1936 = vunpack.c.l.b16 %v1897
        %v1937 = vunpack.c.l.b16 %v1898
        %v1938 = vpack.c.b16 %v1923, %v1922
        %v1939 = vpack.c.b16 %v1925, %v1924
        %v1940 = vpack.c.b16 %v1927, %v1926
        %v1941 = vpack.c.b16 %v1929, %v1928
        %v1942 = vpack.c.b16 %v1931, %v1930
        %v1943 = vpack.c.b16 %v1933, %v1932
        %v1944 = vpack.c.b16 %v1935, %v1934
        %v1945 = vpack.c.b16 %v1937, %v1936
        %1954 = vmatprep.subr.bf16.mxu0 0
        %1955 = vmatpush1.bf16.msra.mxu0 %v1938
        %1956 = vmatprep.subr.bf16.mxu0 0
        %1957 = vmatpush1.bf16.msra.mxu0 %v1939
        %1958 = vmatprep.subr.bf16.mxu0 0
        %1959 = vmatpush1.bf16.msra.mxu0 %v1940
        %1960 = vmatprep.subr.bf16.mxu0 0
        %1961 = vmatpush1.bf16.msra.mxu0 %v1941
        %1962 = vmatprep.subr.bf16.mxu0 0
        %1963 = vmatpush1.bf16.msra.mxu0 %v1942
        %1964 = vmatprep.subr.bf16.mxu0 0
        %1965 = vmatpush1.bf16.msra.mxu0 %v1943
        %1966 = vmatprep.subr.bf16.mxu0 0
        %1967 = vmatpush1.bf16.msra.mxu0 %v1944
        %1968 = vmatprep.subr.bf16.mxu0 0
        %1969 = vmatpush1.bf16.msra.mxu0 %v1945
        %1970 = vmatprep.subr.bf16.mxu0 0
        %1971 = vmatpush1.bf16.msra.mxu0 0
        %1972 = vmatprep.subr.bf16.mxu0 0
        %1973 = vmatpush1.bf16.msra.mxu0 0
        %1974 = vmatprep.subr.bf16.mxu0 0
        %1975 = vmatpush1.bf16.msra.mxu0 0
        %1976 = vmatprep.subr.bf16.mxu0 0
        %1977 = vmatpush1.bf16.msra.mxu0 0
        %1978 = vmatprep.subr.bf16.mxu0 0
        %1979 = vmatpush1.bf16.msra.mxu0 0
        %1980 = vmatprep.subr.bf16.mxu0 0
        %1981 = vmatpush1.bf16.msra.mxu0 0
        %1982 = vmatprep.subr.bf16.mxu0 0
        %1983 = vmatpush1.bf16.msra.mxu0 0
        %1984 = vmatprep.subr.bf16.mxu0 0
        %1985 = vmatpush1.bf16.msra.mxu0 0
        %1986 = vmatprep.mubr.bf16.mxu0 0
        %1987 = vmatmul.mubr.bf16.gmra.mrb[0].mxu0 %v1882
        %v1988 = vpop.f32.mrb[0].mxu0
        %v1989 = vadd.f32 %v1904, %v1988
        %v1990 = vpop.f32.mrb[0].mxu0
        %v1991 = vpop.f32.mrb[0].mxu0
        %v1992 = vadd.f32 %v1904, %v1991
        %v1993 = vpop.f32.mrb[0].mxu0
        %1994 = vdwg.mxu0
        %v1995 = vadd.f32 %v1752, %v1989
        %v1996 = vadd.f32 %v1753, %v1992
        %1997 = vst.msk [vmem:[#allocation3] sm:$0xff] %vm651, %v1995
        %1998 = vst.msk [vmem:[#allocation3 + $0x8] sm:$0xff] %vm651, %v1996
        // Predicated region
        $region77: #{tpu_custom_call.1} parent=71 // pred_check
          %p1999 = pneg %p393
        $region78: #{tpu_custom_call.1} parent=71 // pred_check_branch
          %2001 = sbr.rel (%p1999) target = $region80
        $region79: #{tpu_custom_call.1} parent=71 // pred_region
          %s2002 = smul.u32 2, %s29
          %s2004 = ssub.s32 256, 256
          %2005 = vsyncadd [#allocation4], %s2004
          %s2006 = smul.addr %s2002, 128
          %s2007 = scalar_lea.hbm %s13, %s2006
          %s2008 = sshll.u32 [#allocation3], 4
          %s2009 = int_to_ptr.vmem [resolvable:$true] %s2008
          %2014 = dma.vmem_to_hbm [thread:$0]  %s2009, 256, %s2007, [#allocation4], 128, 128, 8
        $region80: #{tpu_custom_call.1} parent=71 // pred_fallthru
          _
        // Predicated region
        $region81: #{tpu_custom_call.1} parent=71 // pred_check
          %p2015 = pneg %p393
        $region82: #{tpu_custom_call.1} parent=71 // pred_check_branch
          %2017 = sbr.rel (%p2015) target = $region84
        $region83: #{tpu_custom_call.1} parent=71 // pred_region
          %2018 = dma.done [#allocation4], 256
        $region84: #{tpu_custom_call.1} parent=71 // pred_fallthru
          _
      $region72: #{tpu_custom_call.1} parent=5 // pred_fallthru
        _
      %p2019 = scmp.le.s32.totalorder 2, %s20
      // Predicated region
      $region85: #{tpu_custom_call.1} parent=5 // pred_check
        %p2020 = pneg %p2019
      $region86: #{tpu_custom_call.1} parent=5 // pred_check_branch
        %2022 = sbr.rel (%p2020) target = $region88
      $region87: #{tpu_custom_call.1} parent=5 // pred_region
        %s2023 = ssub.s32 %s20, 2
      $region88: #{tpu_custom_call.1} parent=5 // pred_fallthru
        _
    $region6: #{tpu_custom_call.1} parent=1 // loop_footer
      %s24 = sadd.s32 1, %s20
    $region7: #{tpu_custom_call.1} parent=1 // loop_footer_branch
      %19 = sbr.rel target = $region3
    $region8: #{tpu_custom_call.1} parent=1 // loop_exit
      _
    %2024 = vsyncpa [#allocation4], 1
    %s2025 = scalar_lea.sflag [#allocation4], 1
    %2026 = vsyncpa %s2025, 1

</llo_original>
